<compile_context>
chip_gen: v5e
topology: v5e:2x2
jax: 0.10.0
libtpu: 0.0.40
codegen_flags: <defaults>
</compile_context>

<pallas_src>
import jax
import jax.numpy as jnp
from jax.experimental import pallas as pl
from jax.experimental.pallas import tpu as pltpu


# --------------------------------------------------------------------------
# Fused kernel: batched gate pre-activations + batched GCONV left factor
# (both hT-independent), sequential weight-GRU over T, VPU combine, 1 store.
# --------------------------------------------------------------------------
def fused_evolve_gcn_kernel(z_ref, a_ref, xt_ref,
                            wt_ref, uzr_ref, uth_ref, bt_ref,
                            winit_ref, wlin_ref, b_ref, out_ref):
    T, N = out_ref.shape
    F1, F0 = winit_ref.shape            # transposed weight carry: (F1, F0)

    # ------------- Phase 1: hT-independent batched work ------------------
    # (a) gate pre-activations for ALL time steps in ONE MXU push:
    #     (T*F1, F0) @ (F0, 3F0) + (T*F1, 3F0)
    pre_all = (jnp.dot(z_ref[...], wt_ref[...],
                       preferred_element_type=jnp.float32) + bt_ref[...])
    # slice the three gate blocks ONCE (outside the sequential loop)
    pz_all = pre_all[:, 0:F0]
    pr_all = pre_all[:, F0:2 * F0]
    ph_all = pre_all[:, 2 * F0:3 * F0]

    # (b) GCONV left factor for all t (independent of the GRU chain):
    #     AX_T[t] = (A_t @ X_t)^T = X_t^T @ A_t^T
    #     A is fed untransposed: contract last axis of X^T with last axis of A.
    ax_all = jnp.einsum('tfm,tnm->tfn', xt_ref[...], a_ref[...],
                        preferred_element_type=jnp.float32)          # (T, F0, N)

    ut_zr = uzr_ref[...]                # (F0, 2F0) = [U_Z^T | U_R^T]
    ut_h = uth_ref[...]                 # (F0, F0)  = U_H^T

    # ------------- Phase 2: sequential weight-GRU over T ------------------
    # T is small & static -> full unroll (single dependence chain on hT:
    # 2 chained MXU pushes + 3 EUP transcendentals per step).
    hT = winit_ref[...]                 # (F1, F0) = W_init^T
    weff_rows = []
    for t in range(T):
        r0 = t * F1
        u = jnp.dot(hT, ut_zr, preferred_element_type=jnp.float32)   # (F1, 2F0)
        zg = jax.nn.sigmoid(pz_all[r0:r0 + F1, :] + u[:, 0:F0])
        rg = jax.nn.sigmoid(pr_all[r0:r0 + F1, :] + u[:, F0:2 * F0])
        hcand = jnp.tanh(ph_all[r0:r0 + F1, :] +
                         jnp.dot(rg * hT, ut_h,
                                 preferred_element_type=jnp.float32))
        hT = (1.0 - zg) * hT + zg * hcand                             # (F1, F0)

        # lin1 folded into the evolved weight, evaluated on the VPU
        # (scalar-broadcast FMAs from SMEM; no M=1 MXU push on the chain).
        weff = wlin_ref[0, 0] * hT[0:1, :]
        for j in range(1, F1):
            weff = weff + wlin_ref[0, j] * hT[j:j + 1, :]
        weff_rows.append(weff)                                        # (1, F0)

    weff_all = jnp.concatenate(weff_rows, axis=0)                     # (T, F0)

    # ------------- Phase 3: VPU broadcast-MAC over F0, single store -------
    #   Y[t, :] = sum_f W_eff[t, f] * AX_T[t, f, :]
    y = weff_all[:, 0:1] * ax_all[:, 0, :]
    for f in range(1, F0):
        y = y + weff_all[:, f:f + 1] * ax_all[:, f, :]                # (T, N)

    out_ref[...] = y + b_ref[0, 0]      # one lane-dense store, bias added once


# --------------------------------------------------------------------------
# Wrapper: top-k "summarize" (data-dependent gather, kept in JAX), parameter
# re-layout (transposed + stacked gate weights), single fused pallas_call.
# --------------------------------------------------------------------------
def evolve_gcn_reg_forward(A, X, params):
    T, N, F0 = X.shape
    F1 = params["W_init"].shape[1]

    # ---- summarize(): top-k node selection + scaling -----------------------
    # TODO(synk): torch.topk + row gather stays in plain JAX (data-dependent
    #             gather has no clean Pallas equivalent at these shapes).
    p = params["p"]
    y = (X @ p) / jnp.linalg.norm(p)                          # (T, N)
    vals, idx = jax.lax.top_k(y, F1)                          # (T, F1)
    x_top = jnp.take_along_axis(X, idx[:, :, None], axis=1)   # (T, F1, F0)
    z_flat = (x_top * vals[:, :, None]).reshape(T * F1, F0)   # (T*F1, F0)

    # Only the tiny X is pre-transposed; A stays untransposed (no extra
    # read+write of the largest tensor in HBM).
    X_T = jnp.swapaxes(X, 1, 2)                               # (T, F0, N)

    WT_stack = jnp.concatenate(
        [params["W_Z"].T, params["W_R"].T, params["W_H"].T], axis=1)   # (F0, 3F0)
    UT_zr = jnp.concatenate([params["U_Z"].T, params["U_R"].T], axis=1)  # (F0, 2F0)
    UT_h = params["U_H"].T                                               # (F0, F0)
    BT_tiled = jnp.tile(
        jnp.concatenate(
            [params["B_Z"].T, params["B_R"].T, params["B_H"].T], axis=1),
        (T, 1))                                                          # (T*F1, 3F0)
    WT_init = params["W_init"].T                                         # (F1, F0)
    lin_w = params["lin_w"].reshape(1, F1).astype(jnp.float32)           # (1, F1) SMEM
    lin_b = params["lin_b"].reshape(1, 1).astype(jnp.float32)            # (1, 1)  SMEM

    def vfull(arr):
        nd = arr.ndim
        return pl.BlockSpec(arr.shape, lambda i, _nd=nd: (0,) * _nd)

    smem = pl.BlockSpec(memory_space=pltpu.MemorySpace.SMEM)

    out = pl.pallas_call(
        fused_evolve_gcn_kernel,
        out_shape=jax.ShapeDtypeStruct((T, N), jnp.float32),
        grid=(1,),
        in_specs=[
            vfull(z_flat), vfull(A), vfull(X_T),
            vfull(WT_stack), vfull(UT_zr), vfull(UT_h), vfull(BT_tiled),
            vfull(WT_init), smem, smem,
        ],
        out_specs=pl.BlockSpec((T, N), lambda i: (0, 0)),
        compiler_params=pltpu.CompilerParams(dimension_semantics=("arbitrary",)),
    )(z_flat, A, X_T, WT_stack, UT_zr, UT_h, BT_tiled, WT_init, lin_w, lin_b)

    return out                                                # (T, N) == output.squeeze(2)


# --------------------------------------------------------------------------
# Deterministic parameter init (mirrors the shapes in __init__; synthetic)
# --------------------------------------------------------------------------
def init_params(key, F0, F1):
    keys = jax.random.split(key, 14)
    n = lambda k, shape: jax.random.normal(k, shape, dtype=jnp.float32)
    return dict(
        p=n(keys[0], (F0,)),
        W_Z=n(keys[1], (F0, F0)), U_Z=n(keys[2], (F0, F0)), B_Z=n(keys[3], (F0, F1)),
        W_R=n(keys[4], (F0, F0)), U_R=n(keys[5], (F0, F0)), B_R=n(keys[6], (F0, F1)),
        W_H=n(keys[7], (F0, F0)), U_H=n(keys[8], (F0, F0)), B_H=n(keys[9], (F0, F1)),
        W_init=n(keys[10], (F0, F1)),
        U=n(keys[11], (F1 * 2, F1)),        # defined in __init__, unused in forward
        lin_w=n(keys[12], (1, F1)) * 0.5,   # nn.Linear(F1, 1) weight
        lin_b=n(keys[13], (1,)) * 0.1,      # nn.Linear(F1, 1) bias
    )


# --------------------------------------------------------------------------
# Pure-JAX reference (mirrors the PyTorch forward) for a sanity check
# --------------------------------------------------------------------------
def reference_forward(A, X, params):
    T, N, F0 = X.shape
    W = params["W_init"]
    F1 = W.shape[1]
    p = params["p"]
    ys = []
    for ti in range(T):
        Xs = X[ti]
        yv = (Xs @ p) / jnp.linalg.norm(p)
        vals, idx = jax.lax.top_k(yv, F1)
        Zsum = (Xs[idx, :] * vals[:, None]).T                    # (F0, F1)
        H = W
        Zg = jax.nn.sigmoid(params["W_Z"] @ Zsum + params["U_Z"] @ H + params["B_Z"])
        Rg = jax.nn.sigmoid(params["W_R"] @ Zsum + params["U_R"] @ H + params["B_R"])
        Ht = jnp.tanh(params["W_H"] @ Zsum + params["U_H"] @ (Rg * H) + params["B_H"])
        W = (1.0 - Zg) * H + Zg * Ht
        ys.append(A[ti] @ Xs @ W)                                 # GCONV, nonlin=False
    Y = jnp.stack(ys)                                             # (T, N, F1)
    out = Y @ params["lin_w"].T + params["lin_b"]                 # (T, N, 1)
    return out[..., 0]


if __name__ == "__main__":
    # Small shapes consistent with the module: T time steps, N nodes, F0 input
    # features, hidden_feat = [2, 2]  ->  F = [F0, 2, 2].
    T, N, F0 = 8, 16, 4
    hidden_feat = [2, 2]
    F1 = hidden_feat[0]

    key = jax.random.PRNGKey(0)
    ka, kx, kp = jax.random.split(key, 3)
    A = jax.random.normal(ka, (T, N, N), dtype=jnp.float32)   # dense stand-in for sparse A list
    X = jax.random.normal(kx, (T, N, F0), dtype=jnp.float32)
    params = init_params(kp, F0, F1)

    out = jax.jit(evolve_gcn_reg_forward)(A, X, params)
    out = jax.block_until_ready(out)

    assert out.shape == (T, N), out.shape
    ref = reference_forward(A, X, params)
    max_err = float(jnp.max(jnp.abs(out - ref)))
    assert max_err < 1e-3, f"max abs err {max_err}"
    print("KERNEL_OK")
</pallas_src>

<mosaic_0001>
module attributes {stable_mosaic.version = 11 : i64} {
  func.func @fused_evolve_gcn_kernel(%arg0: i32, %arg1: memref<16x4xf32, #tpu.memory_space<vmem>>, %arg2: memref<8x16x16xf32, #tpu.memory_space<vmem>>, %arg3: memref<8x4x16xf32, #tpu.memory_space<vmem>>, %arg4: memref<4x12xf32, #tpu.memory_space<vmem>>, %arg5: memref<4x8xf32, #tpu.memory_space<vmem>>, %arg6: memref<4x4xf32, #tpu.memory_space<vmem>>, %arg7: memref<16x12xf32, #tpu.memory_space<vmem>>, %arg8: memref<2x4xf32, #tpu.memory_space<vmem>>, %arg9: memref<1x2xf32, #tpu.memory_space<smem>>, %arg10: memref<1x1xf32, #tpu.memory_space<smem>>, %arg11: memref<8x16xf32, #tpu.memory_space<vmem>>) attributes {dimension_semantics = [#tpu.dimension_semantics<arbitrary>], iteration_bounds = array<i64: 1>, scalar_prefetch = 0 : i64, scratch_operands = 0 : i64, tpu.core_type = #tpu.core_type<tc>, window_params = [{pipeline_mode = #tpu.pipeline_mode<synchronous>, transform_indices = @transform_0, window_bounds = array<i64: 16, 4>}, {pipeline_mode = #tpu.pipeline_mode<synchronous>, transform_indices = @transform_1, window_bounds = array<i64: 8, 16, 16>}, {pipeline_mode = #tpu.pipeline_mode<synchronous>, transform_indices = @transform_2, window_bounds = array<i64: 8, 4, 16>}, {pipeline_mode = #tpu.pipeline_mode<synchronous>, transform_indices = @transform_3, window_bounds = array<i64: 4, 12>}, {pipeline_mode = #tpu.pipeline_mode<synchronous>, transform_indices = @transform_4, window_bounds = array<i64: 4, 8>}, {pipeline_mode = #tpu.pipeline_mode<synchronous>, transform_indices = @transform_5, window_bounds = array<i64: 4, 4>}, {pipeline_mode = #tpu.pipeline_mode<synchronous>, transform_indices = @transform_6, window_bounds = array<i64: 16, 12>}, {pipeline_mode = #tpu.pipeline_mode<synchronous>, transform_indices = @transform_7, window_bounds = array<i64: 2, 4>}, {transform_indices = @transform_8, window_bounds = array<i64: 1, 2>}, {transform_indices = @transform_9, window_bounds = array<i64: 1, 1>}, {pipeline_mode = #tpu.pipeline_mode<synchronous>, transform_indices = @transform_10, window_bounds = array<i64: 8, 16>}]} {
    %c0 = arith.constant 0 : index
    %c0_0 = arith.constant 0 : index
    %0 = vector.load %arg1[%c0, %c0_0] : memref<16x4xf32, #tpu.memory_space<vmem>>, vector<16x4xf32>
    %c0_1 = arith.constant 0 : index
    %c0_2 = arith.constant 0 : index
    %1 = vector.load %arg4[%c0_1, %c0_2] : memref<4x12xf32, #tpu.memory_space<vmem>>, vector<4x12xf32>
    %cst = arith.constant dense<0.000000e+00> : vector<16x12xf32>
    %2 = tpu.matmul %0, %1, %cst {dimension_numbers = #tpu.dot_dimension_numbers<[1], [0], [0], [1], [0, 0, 1, 1], [], []>} : vector<16x4xf32>, vector<4x12xf32>, vector<16x12xf32> -> vector<16x12xf32>
    %c0_3 = arith.constant 0 : index
    %c0_4 = arith.constant 0 : index
    %3 = vector.load %arg7[%c0_3, %c0_4] : memref<16x12xf32, #tpu.memory_space<vmem>>, vector<16x12xf32>
    %4 = arith.addf %2, %3 : vector<16x12xf32>
    %5 = vector.extract_strided_slice %4 {offsets = [0, 0], sizes = [16, 4], strides = [1, 1]} : vector<16x12xf32> to vector<16x4xf32>
    %6 = vector.extract_strided_slice %4 {offsets = [0, 4], sizes = [16, 4], strides = [1, 1]} : vector<16x12xf32> to vector<16x4xf32>
    %7 = vector.extract_strided_slice %4 {offsets = [0, 8], sizes = [16, 4], strides = [1, 1]} : vector<16x12xf32> to vector<16x4xf32>
    %c0_5 = arith.constant 0 : index
    %c0_6 = arith.constant 0 : index
    %c0_7 = arith.constant 0 : index
    %8 = vector.load %arg3[%c0_5, %c0_6, %c0_7] : memref<8x4x16xf32, #tpu.memory_space<vmem>>, vector<8x4x16xf32>
    %c0_8 = arith.constant 0 : index
    %c0_9 = arith.constant 0 : index
    %c0_10 = arith.constant 0 : index
    %9 = vector.load %arg2[%c0_8, %c0_9, %c0_10] : memref<8x16x16xf32, #tpu.memory_space<vmem>>, vector<8x16x16xf32>
    "tpu.trace_start"() <{level = 10 : i32, message = "tfm,tnm->tfn"}> : () -> ()
    %cst_11 = arith.constant dense<0.000000e+00> : vector<8x4x16xf32>
    %10 = tpu.matmul %8, %9, %cst_11 {dimension_numbers = #tpu.dot_dimension_numbers<[2], [2], [1], [1], [0, 0, 0, 1, 1, 1], [0], [0]>} : vector<8x4x16xf32>, vector<8x16x16xf32>, vector<8x4x16xf32> -> vector<8x4x16xf32>
    "tpu.trace_stop"() : () -> ()
    %c0_12 = arith.constant 0 : index
    %c0_13 = arith.constant 0 : index
    %11 = vector.load %arg5[%c0_12, %c0_13] : memref<4x8xf32, #tpu.memory_space<vmem>>, vector<4x8xf32>
    %c0_14 = arith.constant 0 : index
    %c0_15 = arith.constant 0 : index
    %12 = vector.load %arg6[%c0_14, %c0_15] : memref<4x4xf32, #tpu.memory_space<vmem>>, vector<4x4xf32>
    %c0_16 = arith.constant 0 : index
    %c0_17 = arith.constant 0 : index
    %13 = vector.load %arg8[%c0_16, %c0_17] : memref<2x4xf32, #tpu.memory_space<vmem>>, vector<2x4xf32>
    %cst_18 = arith.constant dense<0.000000e+00> : vector<2x8xf32>
    %14 = tpu.matmul %13, %11, %cst_18 {dimension_numbers = #tpu.dot_dimension_numbers<[1], [0], [0], [1], [0, 0, 1, 1], [], []>} : vector<2x4xf32>, vector<4x8xf32>, vector<2x8xf32> -> vector<2x8xf32>
    %15 = vector.extract_strided_slice %5 {offsets = [0, 0], sizes = [2, 4], strides = [1, 1]} : vector<16x4xf32> to vector<2x4xf32>
    %16 = vector.extract_strided_slice %14 {offsets = [0, 0], sizes = [2, 4], strides = [1, 1]} : vector<2x8xf32> to vector<2x4xf32>
    %17 = arith.addf %15, %16 : vector<2x4xf32>
    %18 = arith.negf %17 : vector<2x4xf32>
    %19 = math.exp %18 : vector<2x4xf32>
    %cst_19 = arith.constant 1.000000e+00 : f32
    %20 = vector.broadcast %cst_19 : f32 to vector<2x4xf32>
    %21 = arith.addf %20, %19 : vector<2x4xf32>
    %22 = arith.divf %20, %21 : vector<2x4xf32>
    %23 = vector.extract_strided_slice %6 {offsets = [0, 0], sizes = [2, 4], strides = [1, 1]} : vector<16x4xf32> to vector<2x4xf32>
    %24 = vector.extract_strided_slice %14 {offsets = [0, 4], sizes = [2, 4], strides = [1, 1]} : vector<2x8xf32> to vector<2x4xf32>
    %25 = arith.addf %23, %24 : vector<2x4xf32>
    %26 = arith.negf %25 : vector<2x4xf32>
    %27 = math.exp %26 : vector<2x4xf32>
    %cst_20 = arith.constant 1.000000e+00 : f32
    %28 = vector.broadcast %cst_20 : f32 to vector<2x4xf32>
    %29 = arith.addf %28, %27 : vector<2x4xf32>
    %30 = arith.divf %28, %29 : vector<2x4xf32>
    %31 = vector.extract_strided_slice %7 {offsets = [0, 0], sizes = [2, 4], strides = [1, 1]} : vector<16x4xf32> to vector<2x4xf32>
    %32 = arith.mulf %30, %13 : vector<2x4xf32>
    %cst_21 = arith.constant dense<0.000000e+00> : vector<2x4xf32>
    %33 = tpu.matmul %32, %12, %cst_21 {dimension_numbers = #tpu.dot_dimension_numbers<[1], [0], [0], [1], [0, 0, 1, 1], [], []>} : vector<2x4xf32>, vector<4x4xf32>, vector<2x4xf32> -> vector<2x4xf32>
    %34 = arith.addf %31, %33 : vector<2x4xf32>
    %35 = math.tanh %34 : vector<2x4xf32>
    %cst_22 = arith.constant 1.000000e+00 : f32
    %36 = vector.broadcast %cst_22 : f32 to vector<2x4xf32>
    %37 = arith.subf %36, %22 : vector<2x4xf32>
    %38 = arith.mulf %37, %13 : vector<2x4xf32>
    %39 = arith.mulf %22, %35 : vector<2x4xf32>
    %40 = arith.addf %38, %39 : vector<2x4xf32>
    %c0_23 = arith.constant 0 : index
    %c0_24 = arith.constant 0 : index
    %41 = memref.load %arg9[%c0_23, %c0_24] : memref<1x2xf32, #tpu.memory_space<smem>>
    %42 = vector.extract_strided_slice %40 {offsets = [0, 0], sizes = [1, 4], strides = [1, 1]} : vector<2x4xf32> to vector<1x4xf32>
    %43 = vector.broadcast %41 : f32 to vector<1x4xf32>
    %44 = arith.mulf %43, %42 : vector<1x4xf32>
    %c0_25 = arith.constant 0 : index
    %c1 = arith.constant 1 : index
    %45 = memref.load %arg9[%c0_25, %c1] : memref<1x2xf32, #tpu.memory_space<smem>>
    %46 = vector.extract_strided_slice %40 {offsets = [1, 0], sizes = [1, 4], strides = [1, 1]} : vector<2x4xf32> to vector<1x4xf32>
    %47 = vector.broadcast %45 : f32 to vector<1x4xf32>
    %48 = arith.mulf %47, %46 : vector<1x4xf32>
    %49 = arith.addf %44, %48 : vector<1x4xf32>
    %cst_26 = arith.constant dense<0.000000e+00> : vector<2x8xf32>
    %50 = tpu.matmul %40, %11, %cst_26 {dimension_numbers = #tpu.dot_dimension_numbers<[1], [0], [0], [1], [0, 0, 1, 1], [], []>} : vector<2x4xf32>, vector<4x8xf32>, vector<2x8xf32> -> vector<2x8xf32>
    %51 = vector.extract_strided_slice %5 {offsets = [2, 0], sizes = [2, 4], strides = [1, 1]} : vector<16x4xf32> to vector<2x4xf32>
    %52 = vector.extract_strided_slice %50 {offsets = [0, 0], sizes = [2, 4], strides = [1, 1]} : vector<2x8xf32> to vector<2x4xf32>
    %53 = arith.addf %51, %52 : vector<2x4xf32>
    %54 = arith.negf %53 : vector<2x4xf32>
    %55 = math.exp %54 : vector<2x4xf32>
    %cst_27 = arith.constant 1.000000e+00 : f32
    %56 = vector.broadcast %cst_27 : f32 to vector<2x4xf32>
    %57 = arith.addf %56, %55 : vector<2x4xf32>
    %58 = arith.divf %56, %57 : vector<2x4xf32>
    %59 = vector.extract_strided_slice %6 {offsets = [2, 0], sizes = [2, 4], strides = [1, 1]} : vector<16x4xf32> to vector<2x4xf32>
    %60 = vector.extract_strided_slice %50 {offsets = [0, 4], sizes = [2, 4], strides = [1, 1]} : vector<2x8xf32> to vector<2x4xf32>
    %61 = arith.addf %59, %60 : vector<2x4xf32>
    %62 = arith.negf %61 : vector<2x4xf32>
    %63 = math.exp %62 : vector<2x4xf32>
    %cst_28 = arith.constant 1.000000e+00 : f32
    %64 = vector.broadcast %cst_28 : f32 to vector<2x4xf32>
    %65 = arith.addf %64, %63 : vector<2x4xf32>
    %66 = arith.divf %64, %65 : vector<2x4xf32>
    %67 = vector.extract_strided_slice %7 {offsets = [2, 0], sizes = [2, 4], strides = [1, 1]} : vector<16x4xf32> to vector<2x4xf32>
    %68 = arith.mulf %66, %40 : vector<2x4xf32>
    %cst_29 = arith.constant dense<0.000000e+00> : vector<2x4xf32>
    %69 = tpu.matmul %68, %12, %cst_29 {dimension_numbers = #tpu.dot_dimension_numbers<[1], [0], [0], [1], [0, 0, 1, 1], [], []>} : vector<2x4xf32>, vector<4x4xf32>, vector<2x4xf32> -> vector<2x4xf32>
    %70 = arith.addf %67, %69 : vector<2x4xf32>
    %71 = math.tanh %70 : vector<2x4xf32>
    %cst_30 = arith.constant 1.000000e+00 : f32
    %72 = vector.broadcast %cst_30 : f32 to vector<2x4xf32>
    %73 = arith.subf %72, %58 : vector<2x4xf32>
    %74 = arith.mulf %73, %40 : vector<2x4xf32>
    %75 = arith.mulf %58, %71 : vector<2x4xf32>
    %76 = arith.addf %74, %75 : vector<2x4xf32>
    %c0_31 = arith.constant 0 : index
    %c0_32 = arith.constant 0 : index
    %77 = memref.load %arg9[%c0_31, %c0_32] : memref<1x2xf32, #tpu.memory_space<smem>>
    %78 = vector.extract_strided_slice %76 {offsets = [0, 0], sizes = [1, 4], strides = [1, 1]} : vector<2x4xf32> to vector<1x4xf32>
    %79 = vector.broadcast %77 : f32 to vector<1x4xf32>
    %80 = arith.mulf %79, %78 : vector<1x4xf32>
    %c0_33 = arith.constant 0 : index
    %c1_34 = arith.constant 1 : index
    %81 = memref.load %arg9[%c0_33, %c1_34] : memref<1x2xf32, #tpu.memory_space<smem>>
    %82 = vector.extract_strided_slice %76 {offsets = [1, 0], sizes = [1, 4], strides = [1, 1]} : vector<2x4xf32> to vector<1x4xf32>
    %83 = vector.broadcast %81 : f32 to vector<1x4xf32>
    %84 = arith.mulf %83, %82 : vector<1x4xf32>
    %85 = arith.addf %80, %84 : vector<1x4xf32>
    %cst_35 = arith.constant dense<0.000000e+00> : vector<2x8xf32>
    %86 = tpu.matmul %76, %11, %cst_35 {dimension_numbers = #tpu.dot_dimension_numbers<[1], [0], [0], [1], [0, 0, 1, 1], [], []>} : vector<2x4xf32>, vector<4x8xf32>, vector<2x8xf32> -> vector<2x8xf32>
    %87 = vector.extract_strided_slice %5 {offsets = [4, 0], sizes = [2, 4], strides = [1, 1]} : vector<16x4xf32> to vector<2x4xf32>
    %88 = vector.extract_strided_slice %86 {offsets = [0, 0], sizes = [2, 4], strides = [1, 1]} : vector<2x8xf32> to vector<2x4xf32>
    %89 = arith.addf %87, %88 : vector<2x4xf32>
    %90 = arith.negf %89 : vector<2x4xf32>
    %91 = math.exp %90 : vector<2x4xf32>
    %cst_36 = arith.constant 1.000000e+00 : f32
    %92 = vector.broadcast %cst_36 : f32 to vector<2x4xf32>
    %93 = arith.addf %92, %91 : vector<2x4xf32>
    %94 = arith.divf %92, %93 : vector<2x4xf32>
    %95 = vector.extract_strided_slice %6 {offsets = [4, 0], sizes = [2, 4], strides = [1, 1]} : vector<16x4xf32> to vector<2x4xf32>
    %96 = vector.extract_strided_slice %86 {offsets = [0, 4], sizes = [2, 4], strides = [1, 1]} : vector<2x8xf32> to vector<2x4xf32>
    %97 = arith.addf %95, %96 : vector<2x4xf32>
    %98 = arith.negf %97 : vector<2x4xf32>
    %99 = math.exp %98 : vector<2x4xf32>
    %cst_37 = arith.constant 1.000000e+00 : f32
    %100 = vector.broadcast %cst_37 : f32 to vector<2x4xf32>
    %101 = arith.addf %100, %99 : vector<2x4xf32>
    %102 = arith.divf %100, %101 : vector<2x4xf32>
    %103 = vector.extract_strided_slice %7 {offsets = [4, 0], sizes = [2, 4], strides = [1, 1]} : vector<16x4xf32> to vector<2x4xf32>
    %104 = arith.mulf %102, %76 : vector<2x4xf32>
    %cst_38 = arith.constant dense<0.000000e+00> : vector<2x4xf32>
    %105 = tpu.matmul %104, %12, %cst_38 {dimension_numbers = #tpu.dot_dimension_numbers<[1], [0], [0], [1], [0, 0, 1, 1], [], []>} : vector<2x4xf32>, vector<4x4xf32>, vector<2x4xf32> -> vector<2x4xf32>
    %106 = arith.addf %103, %105 : vector<2x4xf32>
    %107 = math.tanh %106 : vector<2x4xf32>
    %cst_39 = arith.constant 1.000000e+00 : f32
    %108 = vector.broadcast %cst_39 : f32 to vector<2x4xf32>
    %109 = arith.subf %108, %94 : vector<2x4xf32>
    %110 = arith.mulf %109, %76 : vector<2x4xf32>
    %111 = arith.mulf %94, %107 : vector<2x4xf32>
    %112 = arith.addf %110, %111 : vector<2x4xf32>
    %c0_40 = arith.constant 0 : index
    %c0_41 = arith.constant 0 : index
    %113 = memref.load %arg9[%c0_40, %c0_41] : memref<1x2xf32, #tpu.memory_space<smem>>
    %114 = vector.extract_strided_slice %112 {offsets = [0, 0], sizes = [1, 4], strides = [1, 1]} : vector<2x4xf32> to vector<1x4xf32>
    %115 = vector.broadcast %113 : f32 to vector<1x4xf32>
    %116 = arith.mulf %115, %114 : vector<1x4xf32>
    %c0_42 = arith.constant 0 : index
    %c1_43 = arith.constant 1 : index
    %117 = memref.load %arg9[%c0_42, %c1_43] : memref<1x2xf32, #tpu.memory_space<smem>>
    %118 = vector.extract_strided_slice %112 {offsets = [1, 0], sizes = [1, 4], strides = [1, 1]} : vector<2x4xf32> to vector<1x4xf32>
    %119 = vector.broadcast %117 : f32 to vector<1x4xf32>
    %120 = arith.mulf %119, %118 : vector<1x4xf32>
    %121 = arith.addf %116, %120 : vector<1x4xf32>
    %cst_44 = arith.constant dense<0.000000e+00> : vector<2x8xf32>
    %122 = tpu.matmul %112, %11, %cst_44 {dimension_numbers = #tpu.dot_dimension_numbers<[1], [0], [0], [1], [0, 0, 1, 1], [], []>} : vector<2x4xf32>, vector<4x8xf32>, vector<2x8xf32> -> vector<2x8xf32>
    %123 = vector.extract_strided_slice %5 {offsets = [6, 0], sizes = [2, 4], strides = [1, 1]} : vector<16x4xf32> to vector<2x4xf32>
    %124 = vector.extract_strided_slice %122 {offsets = [0, 0], sizes = [2, 4], strides = [1, 1]} : vector<2x8xf32> to vector<2x4xf32>
    %125 = arith.addf %123, %124 : vector<2x4xf32>
    %126 = arith.negf %125 : vector<2x4xf32>
    %127 = math.exp %126 : vector<2x4xf32>
    %cst_45 = arith.constant 1.000000e+00 : f32
    %128 = vector.broadcast %cst_45 : f32 to vector<2x4xf32>
    %129 = arith.addf %128, %127 : vector<2x4xf32>
    %130 = arith.divf %128, %129 : vector<2x4xf32>
    %131 = vector.extract_strided_slice %6 {offsets = [6, 0], sizes = [2, 4], strides = [1, 1]} : vector<16x4xf32> to vector<2x4xf32>
    %132 = vector.extract_strided_slice %122 {offsets = [0, 4], sizes = [2, 4], strides = [1, 1]} : vector<2x8xf32> to vector<2x4xf32>
    %133 = arith.addf %131, %132 : vector<2x4xf32>
    %134 = arith.negf %133 : vector<2x4xf32>
    %135 = math.exp %134 : vector<2x4xf32>
    %cst_46 = arith.constant 1.000000e+00 : f32
    %136 = vector.broadcast %cst_46 : f32 to vector<2x4xf32>
    %137 = arith.addf %136, %135 : vector<2x4xf32>
    %138 = arith.divf %136, %137 : vector<2x4xf32>
    %139 = vector.extract_strided_slice %7 {offsets = [6, 0], sizes = [2, 4], strides = [1, 1]} : vector<16x4xf32> to vector<2x4xf32>
    %140 = arith.mulf %138, %112 : vector<2x4xf32>
    %cst_47 = arith.constant dense<0.000000e+00> : vector<2x4xf32>
    %141 = tpu.matmul %140, %12, %cst_47 {dimension_numbers = #tpu.dot_dimension_numbers<[1], [0], [0], [1], [0, 0, 1, 1], [], []>} : vector<2x4xf32>, vector<4x4xf32>, vector<2x4xf32> -> vector<2x4xf32>
    %142 = arith.addf %139, %141 : vector<2x4xf32>
    %143 = math.tanh %142 : vector<2x4xf32>
    %cst_48 = arith.constant 1.000000e+00 : f32
    %144 = vector.broadcast %cst_48 : f32 to vector<2x4xf32>
    %145 = arith.subf %144, %130 : vector<2x4xf32>
    %146 = arith.mulf %145, %112 : vector<2x4xf32>
    %147 = arith.mulf %130, %143 : vector<2x4xf32>
    %148 = arith.addf %146, %147 : vector<2x4xf32>
    %c0_49 = arith.constant 0 : index
    %c0_50 = arith.constant 0 : index
    %149 = memref.load %arg9[%c0_49, %c0_50] : memref<1x2xf32, #tpu.memory_space<smem>>
    %150 = vector.extract_strided_slice %148 {offsets = [0, 0], sizes = [1, 4], strides = [1, 1]} : vector<2x4xf32> to vector<1x4xf32>
    %151 = vector.broadcast %149 : f32 to vector<1x4xf32>
    %152 = arith.mulf %151, %150 : vector<1x4xf32>
    %c0_51 = arith.constant 0 : index
    %c1_52 = arith.constant 1 : index
    %153 = memref.load %arg9[%c0_51, %c1_52] : memref<1x2xf32, #tpu.memory_space<smem>>
    %154 = vector.extract_strided_slice %148 {offsets = [1, 0], sizes = [1, 4], strides = [1, 1]} : vector<2x4xf32> to vector<1x4xf32>
    %155 = vector.broadcast %153 : f32 to vector<1x4xf32>
    %156 = arith.mulf %155, %154 : vector<1x4xf32>
    %157 = arith.addf %152, %156 : vector<1x4xf32>
    %cst_53 = arith.constant dense<0.000000e+00> : vector<2x8xf32>
    %158 = tpu.matmul %148, %11, %cst_53 {dimension_numbers = #tpu.dot_dimension_numbers<[1], [0], [0], [1], [0, 0, 1, 1], [], []>} : vector<2x4xf32>, vector<4x8xf32>, vector<2x8xf32> -> vector<2x8xf32>
    %159 = vector.extract_strided_slice %5 {offsets = [8, 0], sizes = [2, 4], strides = [1, 1]} : vector<16x4xf32> to vector<2x4xf32>
    %160 = vector.extract_strided_slice %158 {offsets = [0, 0], sizes = [2, 4], strides = [1, 1]} : vector<2x8xf32> to vector<2x4xf32>
    %161 = arith.addf %159, %160 : vector<2x4xf32>
    %162 = arith.negf %161 : vector<2x4xf32>
    %163 = math.exp %162 : vector<2x4xf32>
    %cst_54 = arith.constant 1.000000e+00 : f32
    %164 = vector.broadcast %cst_54 : f32 to vector<2x4xf32>
    %165 = arith.addf %164, %163 : vector<2x4xf32>
    %166 = arith.divf %164, %165 : vector<2x4xf32>
    %167 = vector.extract_strided_slice %6 {offsets = [8, 0], sizes = [2, 4], strides = [1, 1]} : vector<16x4xf32> to vector<2x4xf32>
    %168 = vector.extract_strided_slice %158 {offsets = [0, 4], sizes = [2, 4], strides = [1, 1]} : vector<2x8xf32> to vector<2x4xf32>
    %169 = arith.addf %167, %168 : vector<2x4xf32>
    %170 = arith.negf %169 : vector<2x4xf32>
    %171 = math.exp %170 : vector<2x4xf32>
    %cst_55 = arith.constant 1.000000e+00 : f32
    %172 = vector.broadcast %cst_55 : f32 to vector<2x4xf32>
    %173 = arith.addf %172, %171 : vector<2x4xf32>
    %174 = arith.divf %172, %173 : vector<2x4xf32>
    %175 = vector.extract_strided_slice %7 {offsets = [8, 0], sizes = [2, 4], strides = [1, 1]} : vector<16x4xf32> to vector<2x4xf32>
    %176 = arith.mulf %174, %148 : vector<2x4xf32>
    %cst_56 = arith.constant dense<0.000000e+00> : vector<2x4xf32>
    %177 = tpu.matmul %176, %12, %cst_56 {dimension_numbers = #tpu.dot_dimension_numbers<[1], [0], [0], [1], [0, 0, 1, 1], [], []>} : vector<2x4xf32>, vector<4x4xf32>, vector<2x4xf32> -> vector<2x4xf32>
    %178 = arith.addf %175, %177 : vector<2x4xf32>
    %179 = math.tanh %178 : vector<2x4xf32>
    %cst_57 = arith.constant 1.000000e+00 : f32
    %180 = vector.broadcast %cst_57 : f32 to vector<2x4xf32>
    %181 = arith.subf %180, %166 : vector<2x4xf32>
    %182 = arith.mulf %181, %148 : vector<2x4xf32>
    %183 = arith.mulf %166, %179 : vector<2x4xf32>
    %184 = arith.addf %182, %183 : vector<2x4xf32>
    %c0_58 = arith.constant 0 : index
    %c0_59 = arith.constant 0 : index
    %185 = memref.load %arg9[%c0_58, %c0_59] : memref<1x2xf32, #tpu.memory_space<smem>>
    %186 = vector.extract_strided_slice %184 {offsets = [0, 0], sizes = [1, 4], strides = [1, 1]} : vector<2x4xf32> to vector<1x4xf32>
    %187 = vector.broadcast %185 : f32 to vector<1x4xf32>
    %188 = arith.mulf %187, %186 : vector<1x4xf32>
    %c0_60 = arith.constant 0 : index
    %c1_61 = arith.constant 1 : index
    %189 = memref.load %arg9[%c0_60, %c1_61] : memref<1x2xf32, #tpu.memory_space<smem>>
    %190 = vector.extract_strided_slice %184 {offsets = [1, 0], sizes = [1, 4], strides = [1, 1]} : vector<2x4xf32> to vector<1x4xf32>
    %191 = vector.broadcast %189 : f32 to vector<1x4xf32>
    %192 = arith.mulf %191, %190 : vector<1x4xf32>
    %193 = arith.addf %188, %192 : vector<1x4xf32>
    %cst_62 = arith.constant dense<0.000000e+00> : vector<2x8xf32>
    %194 = tpu.matmul %184, %11, %cst_62 {dimension_numbers = #tpu.dot_dimension_numbers<[1], [0], [0], [1], [0, 0, 1, 1], [], []>} : vector<2x4xf32>, vector<4x8xf32>, vector<2x8xf32> -> vector<2x8xf32>
    %195 = vector.extract_strided_slice %5 {offsets = [10, 0], sizes = [2, 4], strides = [1, 1]} : vector<16x4xf32> to vector<2x4xf32>
    %196 = vector.extract_strided_slice %194 {offsets = [0, 0], sizes = [2, 4], strides = [1, 1]} : vector<2x8xf32> to vector<2x4xf32>
    %197 = arith.addf %195, %196 : vector<2x4xf32>
    %198 = arith.negf %197 : vector<2x4xf32>
    %199 = math.exp %198 : vector<2x4xf32>
    %cst_63 = arith.constant 1.000000e+00 : f32
    %200 = vector.broadcast %cst_63 : f32 to vector<2x4xf32>
    %201 = arith.addf %200, %199 : vector<2x4xf32>
    %202 = arith.divf %200, %201 : vector<2x4xf32>
    %203 = vector.extract_strided_slice %6 {offsets = [10, 0], sizes = [2, 4], strides = [1, 1]} : vector<16x4xf32> to vector<2x4xf32>
    %204 = vector.extract_strided_slice %194 {offsets = [0, 4], sizes = [2, 4], strides = [1, 1]} : vector<2x8xf32> to vector<2x4xf32>
    %205 = arith.addf %203, %204 : vector<2x4xf32>
    %206 = arith.negf %205 : vector<2x4xf32>
    %207 = math.exp %206 : vector<2x4xf32>
    %cst_64 = arith.constant 1.000000e+00 : f32
    %208 = vector.broadcast %cst_64 : f32 to vector<2x4xf32>
    %209 = arith.addf %208, %207 : vector<2x4xf32>
    %210 = arith.divf %208, %209 : vector<2x4xf32>
    %211 = vector.extract_strided_slice %7 {offsets = [10, 0], sizes = [2, 4], strides = [1, 1]} : vector<16x4xf32> to vector<2x4xf32>
    %212 = arith.mulf %210, %184 : vector<2x4xf32>
    %cst_65 = arith.constant dense<0.000000e+00> : vector<2x4xf32>
    %213 = tpu.matmul %212, %12, %cst_65 {dimension_numbers = #tpu.dot_dimension_numbers<[1], [0], [0], [1], [0, 0, 1, 1], [], []>} : vector<2x4xf32>, vector<4x4xf32>, vector<2x4xf32> -> vector<2x4xf32>
    %214 = arith.addf %211, %213 : vector<2x4xf32>
    %215 = math.tanh %214 : vector<2x4xf32>
    %cst_66 = arith.constant 1.000000e+00 : f32
    %216 = vector.broadcast %cst_66 : f32 to vector<2x4xf32>
    %217 = arith.subf %216, %202 : vector<2x4xf32>
    %218 = arith.mulf %217, %184 : vector<2x4xf32>
    %219 = arith.mulf %202, %215 : vector<2x4xf32>
    %220 = arith.addf %218, %219 : vector<2x4xf32>
    %c0_67 = arith.constant 0 : index
    %c0_68 = arith.constant 0 : index
    %221 = memref.load %arg9[%c0_67, %c0_68] : memref<1x2xf32, #tpu.memory_space<smem>>
    %222 = vector.extract_strided_slice %220 {offsets = [0, 0], sizes = [1, 4], strides = [1, 1]} : vector<2x4xf32> to vector<1x4xf32>
    %223 = vector.broadcast %221 : f32 to vector<1x4xf32>
    %224 = arith.mulf %223, %222 : vector<1x4xf32>
    %c0_69 = arith.constant 0 : index
    %c1_70 = arith.constant 1 : index
    %225 = memref.load %arg9[%c0_69, %c1_70] : memref<1x2xf32, #tpu.memory_space<smem>>
    %226 = vector.extract_strided_slice %220 {offsets = [1, 0], sizes = [1, 4], strides = [1, 1]} : vector<2x4xf32> to vector<1x4xf32>
    %227 = vector.broadcast %225 : f32 to vector<1x4xf32>
    %228 = arith.mulf %227, %226 : vector<1x4xf32>
    %229 = arith.addf %224, %228 : vector<1x4xf32>
    %cst_71 = arith.constant dense<0.000000e+00> : vector<2x8xf32>
    %230 = tpu.matmul %220, %11, %cst_71 {dimension_numbers = #tpu.dot_dimension_numbers<[1], [0], [0], [1], [0, 0, 1, 1], [], []>} : vector<2x4xf32>, vector<4x8xf32>, vector<2x8xf32> -> vector<2x8xf32>
    %231 = vector.extract_strided_slice %5 {offsets = [12, 0], sizes = [2, 4], strides = [1, 1]} : vector<16x4xf32> to vector<2x4xf32>
    %232 = vector.extract_strided_slice %230 {offsets = [0, 0], sizes = [2, 4], strides = [1, 1]} : vector<2x8xf32> to vector<2x4xf32>
    %233 = arith.addf %231, %232 : vector<2x4xf32>
    %234 = arith.negf %233 : vector<2x4xf32>
    %235 = math.exp %234 : vector<2x4xf32>
    %cst_72 = arith.constant 1.000000e+00 : f32
    %236 = vector.broadcast %cst_72 : f32 to vector<2x4xf32>
    %237 = arith.addf %236, %235 : vector<2x4xf32>
    %238 = arith.divf %236, %237 : vector<2x4xf32>
    %239 = vector.extract_strided_slice %6 {offsets = [12, 0], sizes = [2, 4], strides = [1, 1]} : vector<16x4xf32> to vector<2x4xf32>
    %240 = vector.extract_strided_slice %230 {offsets = [0, 4], sizes = [2, 4], strides = [1, 1]} : vector<2x8xf32> to vector<2x4xf32>
    %241 = arith.addf %239, %240 : vector<2x4xf32>
    %242 = arith.negf %241 : vector<2x4xf32>
    %243 = math.exp %242 : vector<2x4xf32>
    %cst_73 = arith.constant 1.000000e+00 : f32
    %244 = vector.broadcast %cst_73 : f32 to vector<2x4xf32>
    %245 = arith.addf %244, %243 : vector<2x4xf32>
    %246 = arith.divf %244, %245 : vector<2x4xf32>
    %247 = vector.extract_strided_slice %7 {offsets = [12, 0], sizes = [2, 4], strides = [1, 1]} : vector<16x4xf32> to vector<2x4xf32>
    %248 = arith.mulf %246, %220 : vector<2x4xf32>
    %cst_74 = arith.constant dense<0.000000e+00> : vector<2x4xf32>
    %249 = tpu.matmul %248, %12, %cst_74 {dimension_numbers = #tpu.dot_dimension_numbers<[1], [0], [0], [1], [0, 0, 1, 1], [], []>} : vector<2x4xf32>, vector<4x4xf32>, vector<2x4xf32> -> vector<2x4xf32>
    %250 = arith.addf %247, %249 : vector<2x4xf32>
    %251 = math.tanh %250 : vector<2x4xf32>
    %cst_75 = arith.constant 1.000000e+00 : f32
    %252 = vector.broadcast %cst_75 : f32 to vector<2x4xf32>
    %253 = arith.subf %252, %238 : vector<2x4xf32>
    %254 = arith.mulf %253, %220 : vector<2x4xf32>
    %255 = arith.mulf %238, %251 : vector<2x4xf32>
    %256 = arith.addf %254, %255 : vector<2x4xf32>
    %c0_76 = arith.constant 0 : index
    %c0_77 = arith.constant 0 : index
    %257 = memref.load %arg9[%c0_76, %c0_77] : memref<1x2xf32, #tpu.memory_space<smem>>
    %258 = vector.extract_strided_slice %256 {offsets = [0, 0], sizes = [1, 4], strides = [1, 1]} : vector<2x4xf32> to vector<1x4xf32>
    %259 = vector.broadcast %257 : f32 to vector<1x4xf32>
    %260 = arith.mulf %259, %258 : vector<1x4xf32>
    %c0_78 = arith.constant 0 : index
    %c1_79 = arith.constant 1 : index
    %261 = memref.load %arg9[%c0_78, %c1_79] : memref<1x2xf32, #tpu.memory_space<smem>>
    %262 = vector.extract_strided_slice %256 {offsets = [1, 0], sizes = [1, 4], strides = [1, 1]} : vector<2x4xf32> to vector<1x4xf32>
    %263 = vector.broadcast %261 : f32 to vector<1x4xf32>
    %264 = arith.mulf %263, %262 : vector<1x4xf32>
    %265 = arith.addf %260, %264 : vector<1x4xf32>
    %cst_80 = arith.constant dense<0.000000e+00> : vector<2x8xf32>
    %266 = tpu.matmul %256, %11, %cst_80 {dimension_numbers = #tpu.dot_dimension_numbers<[1], [0], [0], [1], [0, 0, 1, 1], [], []>} : vector<2x4xf32>, vector<4x8xf32>, vector<2x8xf32> -> vector<2x8xf32>
    %267 = vector.extract_strided_slice %5 {offsets = [14, 0], sizes = [2, 4], strides = [1, 1]} : vector<16x4xf32> to vector<2x4xf32>
    %268 = vector.extract_strided_slice %266 {offsets = [0, 0], sizes = [2, 4], strides = [1, 1]} : vector<2x8xf32> to vector<2x4xf32>
    %269 = arith.addf %267, %268 : vector<2x4xf32>
    %270 = arith.negf %269 : vector<2x4xf32>
    %271 = math.exp %270 : vector<2x4xf32>
    %cst_81 = arith.constant 1.000000e+00 : f32
    %272 = vector.broadcast %cst_81 : f32 to vector<2x4xf32>
    %273 = arith.addf %272, %271 : vector<2x4xf32>
    %274 = arith.divf %272, %273 : vector<2x4xf32>
    %275 = vector.extract_strided_slice %6 {offsets = [14, 0], sizes = [2, 4], strides = [1, 1]} : vector<16x4xf32> to vector<2x4xf32>
    %276 = vector.extract_strided_slice %266 {offsets = [0, 4], sizes = [2, 4], strides = [1, 1]} : vector<2x8xf32> to vector<2x4xf32>
    %277 = arith.addf %275, %276 : vector<2x4xf32>
    %278 = arith.negf %277 : vector<2x4xf32>
    %279 = math.exp %278 : vector<2x4xf32>
    %cst_82 = arith.constant 1.000000e+00 : f32
    %280 = vector.broadcast %cst_82 : f32 to vector<2x4xf32>
    %281 = arith.addf %280, %279 : vector<2x4xf32>
    %282 = arith.divf %280, %281 : vector<2x4xf32>
    %283 = vector.extract_strided_slice %7 {offsets = [14, 0], sizes = [2, 4], strides = [1, 1]} : vector<16x4xf32> to vector<2x4xf32>
    %284 = arith.mulf %282, %256 : vector<2x4xf32>
    %cst_83 = arith.constant dense<0.000000e+00> : vector<2x4xf32>
    %285 = tpu.matmul %284, %12, %cst_83 {dimension_numbers = #tpu.dot_dimension_numbers<[1], [0], [0], [1], [0, 0, 1, 1], [], []>} : vector<2x4xf32>, vector<4x4xf32>, vector<2x4xf32> -> vector<2x4xf32>
    %286 = arith.addf %283, %285 : vector<2x4xf32>
    %287 = math.tanh %286 : vector<2x4xf32>
    %cst_84 = arith.constant 1.000000e+00 : f32
    %288 = vector.broadcast %cst_84 : f32 to vector<2x4xf32>
    %289 = arith.subf %288, %274 : vector<2x4xf32>
    %290 = arith.mulf %289, %256 : vector<2x4xf32>
    %291 = arith.mulf %274, %287 : vector<2x4xf32>
    %292 = arith.addf %290, %291 : vector<2x4xf32>
    %c0_85 = arith.constant 0 : index
    %c0_86 = arith.constant 0 : index
    %293 = memref.load %arg9[%c0_85, %c0_86] : memref<1x2xf32, #tpu.memory_space<smem>>
    %294 = vector.extract_strided_slice %292 {offsets = [0, 0], sizes = [1, 4], strides = [1, 1]} : vector<2x4xf32> to vector<1x4xf32>
    %295 = vector.broadcast %293 : f32 to vector<1x4xf32>
    %296 = arith.mulf %295, %294 : vector<1x4xf32>
    %c0_87 = arith.constant 0 : index
    %c1_88 = arith.constant 1 : index
    %297 = memref.load %arg9[%c0_87, %c1_88] : memref<1x2xf32, #tpu.memory_space<smem>>
    %298 = vector.extract_strided_slice %292 {offsets = [1, 0], sizes = [1, 4], strides = [1, 1]} : vector<2x4xf32> to vector<1x4xf32>
    %299 = vector.broadcast %297 : f32 to vector<1x4xf32>
    %300 = arith.mulf %299, %298 : vector<1x4xf32>
    %301 = arith.addf %296, %300 : vector<1x4xf32>
    %302 = tpu.concatenate %49, %85, %121, %157, %193, %229, %265, %301 in 0 : vector<1x4xf32>, vector<1x4xf32>, vector<1x4xf32>, vector<1x4xf32>, vector<1x4xf32>, vector<1x4xf32>, vector<1x4xf32>, vector<1x4xf32> -> vector<8x4xf32>
    %303 = vector.extract_strided_slice %302 {offsets = [0, 0], sizes = [8, 1], strides = [1, 1]} : vector<8x4xf32> to vector<8x1xf32>
    %304 = vector.extract_strided_slice %10 {offsets = [0, 0, 0], sizes = [8, 1, 16], strides = [1, 1, 1]} : vector<8x4x16xf32> to vector<8x1x16xf32>
    %305 = vector.shape_cast %304 : vector<8x1x16xf32> to vector<8x16xf32>
    %306 = vector.broadcast %303 : vector<8x1xf32> to vector<8x16xf32>
    %307 = arith.mulf %306, %305 : vector<8x16xf32>
    %308 = vector.extract_strided_slice %302 {offsets = [0, 1], sizes = [8, 1], strides = [1, 1]} : vector<8x4xf32> to vector<8x1xf32>
    %309 = vector.extract_strided_slice %10 {offsets = [0, 1, 0], sizes = [8, 1, 16], strides = [1, 1, 1]} : vector<8x4x16xf32> to vector<8x1x16xf32>
    %310 = vector.shape_cast %309 : vector<8x1x16xf32> to vector<8x16xf32>
    %311 = vector.broadcast %308 : vector<8x1xf32> to vector<8x16xf32>
    %312 = arith.mulf %311, %310 : vector<8x16xf32>
    %313 = arith.addf %307, %312 : vector<8x16xf32>
    %314 = vector.extract_strided_slice %302 {offsets = [0, 2], sizes = [8, 1], strides = [1, 1]} : vector<8x4xf32> to vector<8x1xf32>
    %315 = vector.extract_strided_slice %10 {offsets = [0, 2, 0], sizes = [8, 1, 16], strides = [1, 1, 1]} : vector<8x4x16xf32> to vector<8x1x16xf32>
    %316 = vector.shape_cast %315 : vector<8x1x16xf32> to vector<8x16xf32>
    %317 = vector.broadcast %314 : vector<8x1xf32> to vector<8x16xf32>
    %318 = arith.mulf %317, %316 : vector<8x16xf32>
    %319 = arith.addf %313, %318 : vector<8x16xf32>
    %320 = vector.extract_strided_slice %302 {offsets = [0, 3], sizes = [8, 1], strides = [1, 1]} : vector<8x4xf32> to vector<8x1xf32>
    %321 = vector.extract_strided_slice %10 {offsets = [0, 3, 0], sizes = [8, 1, 16], strides = [1, 1, 1]} : vector<8x4x16xf32> to vector<8x1x16xf32>
    %322 = vector.shape_cast %321 : vector<8x1x16xf32> to vector<8x16xf32>
    %323 = vector.broadcast %320 : vector<8x1xf32> to vector<8x16xf32>
    %324 = arith.mulf %323, %322 : vector<8x16xf32>
    %325 = arith.addf %319, %324 : vector<8x16xf32>
    %c0_89 = arith.constant 0 : index
    %c0_90 = arith.constant 0 : index
    %326 = memref.load %arg10[%c0_89, %c0_90] : memref<1x1xf32, #tpu.memory_space<smem>>
    %327 = vector.broadcast %326 : f32 to vector<8x16xf32>
    %328 = arith.addf %325, %327 : vector<8x16xf32>
    %c0_91 = arith.constant 0 : index
    %c0_92 = arith.constant 0 : index
    %329 = vector.load %arg11[%c0_91, %c0_92] : memref<8x16xf32, #tpu.memory_space<vmem>>, vector<8x16xf32>
    tpu.vector_store %arg11[%c0_91, %c0_92], %328 {strides = array<i32>} : memref<8x16xf32, #tpu.memory_space<vmem>>, vector<8x16xf32>,
    return
  }
  func.func @transform_0(%arg0: i32) -> (i32, i32) {
    %c0_i32 = arith.constant 0 : i32
    %c0_i32_0 = arith.constant 0 : i32
    %c0_i32_1 = arith.constant 0 : i32
    return %c0_i32, %c0_i32_0 : i32, i32
  }
  func.func @transform_1(%arg0: i32) -> (i32, i32, i32) {
    %c0_i32 = arith.constant 0 : i32
    %c0_i32_0 = arith.constant 0 : i32
    %c0_i32_1 = arith.constant 0 : i32
    %c0_i32_2 = arith.constant 0 : i32
    return %c0_i32, %c0_i32_0, %c0_i32_1 : i32, i32, i32
  }
  func.func @transform_2(%arg0: i32) -> (i32, i32, i32) {
    %c0_i32 = arith.constant 0 : i32
    %c0_i32_0 = arith.constant 0 : i32
    %c0_i32_1 = arith.constant 0 : i32
    %c0_i32_2 = arith.constant 0 : i32
    return %c0_i32, %c0_i32_0, %c0_i32_1 : i32, i32, i32
  }
  func.func @transform_3(%arg0: i32) -> (i32, i32) {
    %c0_i32 = arith.constant 0 : i32
    %c0_i32_0 = arith.constant 0 : i32
    %c0_i32_1 = arith.constant 0 : i32
    return %c0_i32, %c0_i32_0 : i32, i32
  }
  func.func @transform_4(%arg0: i32) -> (i32, i32) {
    %c0_i32 = arith.constant 0 : i32
    %c0_i32_0 = arith.constant 0 : i32
    %c0_i32_1 = arith.constant 0 : i32
    return %c0_i32, %c0_i32_0 : i32, i32
  }
  func.func @transform_5(%arg0: i32) -> (i32, i32) {
    %c0_i32 = arith.constant 0 : i32
    %c0_i32_0 = arith.constant 0 : i32
    %c0_i32_1 = arith.constant 0 : i32
    return %c0_i32, %c0_i32_0 : i32, i32
  }
  func.func @transform_6(%arg0: i32) -> (i32, i32) {
    %c0_i32 = arith.constant 0 : i32
    %c0_i32_0 = arith.constant 0 : i32
    %c0_i32_1 = arith.constant 0 : i32
    return %c0_i32, %c0_i32_0 : i32, i32
  }
  func.func @transform_7(%arg0: i32) -> (i32, i32) {
    %c0_i32 = arith.constant 0 : i32
    %c0_i32_0 = arith.constant 0 : i32
    %c0_i32_1 = arith.constant 0 : i32
    return %c0_i32, %c0_i32_0 : i32, i32
  }
  func.func @transform_8(%arg0: i32) -> (i32, i32) {
    %c0_i32 = arith.constant 0 : i32
    %c0_i32_0 = arith.constant 0 : i32
    %c0_i32_1 = arith.constant 0 : i32
    return %c0_i32, %c0_i32_0 : i32, i32
  }
  func.func @transform_9(%arg0: i32) -> (i32, i32) {
    %c0_i32 = arith.constant 0 : i32
    %c0_i32_0 = arith.constant 0 : i32
    %c0_i32_1 = arith.constant 0 : i32
    return %c0_i32, %c0_i32_0 : i32, i32
  }
  func.func @transform_10(%arg0: i32) -> (i32, i32) {
    %c0_i32 = arith.constant 0 : i32
    %c0_i32_0 = arith.constant 0 : i32
    %c0_i32_1 = arith.constant 0 : i32
    return %c0_i32, %c0_i32_0 : i32, i32
  }
}

</mosaic_0001>

<llo_original>
// kernel: evolve_gcn_reg_forward.1
$region0: #{evolve_gcn_reg_forward.1}
  #allocation0 [shape = 'u32[]', space=smem, size = 0x4, offset = 0x4, fixed_abs, tag = 'smem constant byte address 0x4 - core index']
  #allocation1 [shape = 'u32[72,128]{1,0:T(1,128)}', space=vmem, size = 0x9000, scoped, tag = 'internal scratch']
  #allocation2 [shape = 'f32[1,1]{1,0:T(1,128)S(6)}', space=smem, size = 0x200, scoped, tag = 'scoped memory for evolve_gcn_reg_forward.1']
  %s0 = inlined_call_operand.vmem [shape: f32[16,4], index: 0, kind: input, shape index: {}]
  %s1 = inlined_call_operand.vmem [shape: f32[8,16,16], index: 1, kind: input, shape index: {}]
  %s2 = inlined_call_operand.vmem [shape: f32[8,4,16], index: 2, kind: input, shape index: {}]
  %s3 = inlined_call_operand.vmem [shape: f32[4,12], index: 3, kind: input, shape index: {}]
  %s4 = inlined_call_operand.vmem [shape: f32[4,8], index: 4, kind: input, shape index: {}]
  %s5 = inlined_call_operand.vmem [shape: f32[4,4], index: 5, kind: input, shape index: {}]
  %s6 = inlined_call_operand.vmem [shape: f32[16,12], index: 6, kind: input, shape index: {}]
  %s7 = inlined_call_operand.vmem [shape: f32[2,4], index: 7, kind: input, shape index: {}]
  %s8 = inlined_call_operand.vmem [shape: f32[1,2], index: 8, kind: input, shape index: {}]
  %s9 = inlined_call_operand.<no memory space> [shape: f32[1,1], index: 9, kind: input, shape index: {}]
  %s10 = inlined_call_operand.hbm [shape: f32[8,16], index: 10, kind: output, shape index: {}]
  %s11 = sld [smem:[#allocation0]]
  $region54: #{evolve_gcn_reg_forward.1} parent=0
    _
  %s13 = ssub.s32 1, %s11
  %s14 = scalar_select 0, %s13, %s11
  %15 = sst [smem:[#allocation2]] %s9
  $region1: #{evolve_gcn_reg_forward.1} parent=0
    #allocation3 [shape = 'u8[512]{0}', space=smem, size = 0x200, scoped, tag = 'input window, operand 8, single buffered']
    #allocation4 [shape = 's32[1]{0}', space=sflag, size = 0x4, scoped, tag = 'scoped memory for evolve_gcn_reg_forward.1']
    #allocation5 [shape = 's32[1]{0}', space=sflag, size = 0x4, scoped, tag = 'scoped memory for evolve_gcn_reg_forward.1']
    #allocation6 [shape = 'u8[4096]{0}', space=vmem, size = 0x1000, scoped, tag = 'output window, operand 0, single buffered']
    %16 = vsyncpa [#allocation5], 0
    %17 = vsyncpa [#allocation4], 0
    // Predicated region
    $region2: #{evolve_gcn_reg_forward.1} parent=1 // pred_check
      _
    $region3: #{evolve_gcn_reg_forward.1} parent=1 // pred_check_branch
      %19 = sbr.rel (0) target = $region5
    $region4: #{evolve_gcn_reg_forward.1} parent=1 // pred_region
      _
    $region5: #{evolve_gcn_reg_forward.1} parent=1 // pred_fallthru
      _
    // Predicated region
    $region6: #{evolve_gcn_reg_forward.1} parent=1 // pred_check
      _
    $region7: #{evolve_gcn_reg_forward.1} parent=1 // pred_check_branch
      %21 = sbr.rel (0) target = $region9
    $region8: #{evolve_gcn_reg_forward.1} parent=1 // pred_region
      _
    $region9: #{evolve_gcn_reg_forward.1} parent=1 // pred_fallthru
      _
    // Predicated region
    $region10: #{evolve_gcn_reg_forward.1} parent=1 // pred_check
      _
    $region11: #{evolve_gcn_reg_forward.1} parent=1 // pred_check_branch
      %23 = sbr.rel (0) target = $region13
    $region12: #{evolve_gcn_reg_forward.1} parent=1 // pred_region
      _
    $region13: #{evolve_gcn_reg_forward.1} parent=1 // pred_fallthru
      _
    // Predicated region
    $region14: #{evolve_gcn_reg_forward.1} parent=1 // pred_check
      _
    $region15: #{evolve_gcn_reg_forward.1} parent=1 // pred_check_branch
      %25 = sbr.rel (0) target = $region17
    $region16: #{evolve_gcn_reg_forward.1} parent=1 // pred_region
      _
    $region17: #{evolve_gcn_reg_forward.1} parent=1 // pred_fallthru
      _
    // Predicated region
    $region18: #{evolve_gcn_reg_forward.1} parent=1 // pred_check
      _
    $region19: #{evolve_gcn_reg_forward.1} parent=1 // pred_check_branch
      %27 = sbr.rel (0) target = $region21
    $region20: #{evolve_gcn_reg_forward.1} parent=1 // pred_region
      _
    $region21: #{evolve_gcn_reg_forward.1} parent=1 // pred_fallthru
      _
    // Predicated region
    $region22: #{evolve_gcn_reg_forward.1} parent=1 // pred_check
      _
    $region23: #{evolve_gcn_reg_forward.1} parent=1 // pred_check_branch
      %29 = sbr.rel (0) target = $region25
    $region24: #{evolve_gcn_reg_forward.1} parent=1 // pred_region
      _
    $region25: #{evolve_gcn_reg_forward.1} parent=1 // pred_fallthru
      _
    // Predicated region
    $region26: #{evolve_gcn_reg_forward.1} parent=1 // pred_check
      _
    $region27: #{evolve_gcn_reg_forward.1} parent=1 // pred_check_branch
      %31 = sbr.rel (0) target = $region29
    $region28: #{evolve_gcn_reg_forward.1} parent=1 // pred_region
      _
    $region29: #{evolve_gcn_reg_forward.1} parent=1 // pred_fallthru
      _
    // Predicated region
    $region30: #{evolve_gcn_reg_forward.1} parent=1 // pred_check
      _
    $region31: #{evolve_gcn_reg_forward.1} parent=1 // pred_check_branch
      %33 = sbr.rel (0) target = $region33
    $region32: #{evolve_gcn_reg_forward.1} parent=1 // pred_region
      _
    $region33: #{evolve_gcn_reg_forward.1} parent=1 // pred_fallthru
      _
    // Predicated region
    $region34: #{evolve_gcn_reg_forward.1} parent=1 // pred_check
      _
    $region35: #{evolve_gcn_reg_forward.1} parent=1 // pred_check_branch
      %35 = sbr.rel (0) target = $region37
    $region36: #{evolve_gcn_reg_forward.1} parent=1 // pred_region
      %37 = vsyncadd [#allocation5], 0
      %s39 = sshll.u32 %s8, 4
      %s40 = int_to_ptr.vmem [resolvable:$true] %s39
      %42 = dma.vmem_to_smem %s40, 16, [#allocation3], [#allocation5]
    $region37: #{evolve_gcn_reg_forward.1} parent=1 // pred_fallthru
      _
    // Predicated region
    $region38: #{evolve_gcn_reg_forward.1} parent=1 // pred_check
      _
    $region39: #{evolve_gcn_reg_forward.1} parent=1 // pred_check_branch
      %44 = sbr.rel (0) target = $region41
    $region40: #{evolve_gcn_reg_forward.1} parent=1 // pred_region
      _
    $region41: #{evolve_gcn_reg_forward.1} parent=1 // pred_fallthru
      _
    // Predicated region
    $region42: #{evolve_gcn_reg_forward.1} parent=1 // pred_check
      _
    $region43: #{evolve_gcn_reg_forward.1} parent=1 // pred_check_branch
      %46 = sbr.rel (0) target = $region45
    $region44: #{evolve_gcn_reg_forward.1} parent=1 // pred_region
      %48 = dma.done [#allocation5], 16
    $region45: #{evolve_gcn_reg_forward.1} parent=1 // pred_fallthru
      _
    %49 = sfence
    %v50 = vld [vmem:[%s0] sm:$0xff]
    %v51 = vld [vmem:[%s0 + $0x8] sm:$0xff]
    %v52 = vld [vmem:[%s3] sm:$0xf]
    %v53 = vld [vmem:[%s6] sm:$0xff]
    %v54 = vld [vmem:[%s6 + $0x8] sm:$0xff]
    %vm55 = vcmask 31744
    %v57 = vsel %vm55, %v50, 0
    %v60 = vsel %vm55, %v51, 0
    %vm62 = vcmask 1043456
    %v64 = vsel %vm62, %v52, 0
    %66 = vmatpush.msra.mxu0 0.0
    %67 = vmatpush.msra.mxu0 0.0
    %68 = vmatpush.msra.mxu0 0.0
    %69 = vmatpush.msra.mxu0 0.0
    %70 = vmatpush.msra.mxu0 0.0
    %71 = vmatpush.msra.mxu0 0.0
    %72 = vmatpush.msra.mxu0 0.0
    %73 = vmatpush.msra.mxu0 0.0
    %74 = vmatpush.msra.mxu0 0.0
    %75 = vmatpush.msra.mxu0 0.0
    %76 = vmatpush.msra.mxu0 0.0
    %77 = vmatpush.msra.mxu0 0.0
    %78 = vmatpush.msra.mxu0 0.0
    %79 = vmatpush.msra.mxu0 0.0
    %80 = vmatpush.msra.mxu0 0.0
    %81 = vmatpush.msra.mxu0 %v64
    %82 = vmatmul.f32.gmra.mxu0 %v57
    %v83 = vpop.f32.mrf.mxu0
    %v84 = vadd.f32 %v53, %v83
    %85 = vmatmul.f32.gmra.mxu0 %v60
    %v86 = vpop.f32.mrf.mxu0
    %v87 = vadd.f32 %v54, %v86
    %88 = vdwg.mxu0
    %v89 = vld [vmem:[%s2] sm:$0xf]
    %v90 = vld [vmem:[%s2 + $0x4] sm:$0xf]
    %v91 = vld [vmem:[%s2 + $0x8] sm:$0xf]
    %v92 = vld [vmem:[%s2 + $0xc] sm:$0xf]
    %v93 = vld [vmem:[%s2 + $0x10] sm:$0xf]
    %v94 = vld [vmem:[%s2 + $0x14] sm:$0xf]
    %v95 = vld [vmem:[%s2 + $0x18] sm:$0xf]
    %v96 = vld [vmem:[%s2 + $0x1c] sm:$0xf]
    %v97 = vld [vmem:[%s1] sm:$0xff]
    %v98 = vld [vmem:[%s1 + $0x8] sm:$0xff]
    %v99 = vld [vmem:[%s1 + $0x10] sm:$0xff]
    %v100 = vld [vmem:[%s1 + $0x18] sm:$0xff]
    %v101 = vld [vmem:[%s1 + $0x20] sm:$0xff]
    %v102 = vld [vmem:[%s1 + $0x28] sm:$0xff]
    %v103 = vld [vmem:[%s1 + $0x30] sm:$0xff]
    %v104 = vld [vmem:[%s1 + $0x38] sm:$0xff]
    %v105 = vld [vmem:[%s1 + $0x40] sm:$0xff]
    %v106 = vld [vmem:[%s1 + $0x48] sm:$0xff]
    %v107 = vld [vmem:[%s1 + $0x50] sm:$0xff]
    %v108 = vld [vmem:[%s1 + $0x58] sm:$0xff]
    %v109 = vld [vmem:[%s1 + $0x60] sm:$0xff]
    %v110 = vld [vmem:[%s1 + $0x68] sm:$0xff]
    %v111 = vld [vmem:[%s1 + $0x70] sm:$0xff]
    %v112 = vld [vmem:[%s1 + $0x78] sm:$0xff]
    %vm113 = vcmask 130048
    %v115 = vsel %vm113, %v89, 0
    %v118 = vsel %vm113, %v97, 0
    %v121 = vsel %vm113, %v98, 0
    %123 = vmatpush.xpose.msra.mxu0 0.0
    %124 = vmatpush.xpose.msra.mxu0 0.0
    %125 = vmatpush.xpose.msra.mxu0 0.0
    %126 = vmatpush.xpose.msra.mxu0 0.0
    %127 = vmatpush.xpose.msra.mxu0 0.0
    %128 = vmatpush.xpose.msra.mxu0 0.0
    %129 = vmatpush.xpose.msra.mxu0 0.0
    %130 = vmatpush.xpose.msra.mxu0 0.0
    %131 = vmatpush.xpose.msra.mxu0 0.0
    %132 = vmatpush.xpose.msra.mxu0 0.0
    %133 = vmatpush.xpose.msra.mxu0 0.0
    %134 = vmatpush.xpose.msra.mxu0 0.0
    %135 = vmatpush.xpose.msra.mxu0 0.0
    %136 = vmatpush.xpose.msra.mxu0 0.0
    %137 = vmatpush.xpose.msra.mxu0 %v121
    %138 = vmatpush.xpose.msra.mxu0 %v118
    %139 = vmatmul.f32.gmra.mxu0 %v115
    %v140 = vpop.f32.mrf.mxu0
    %v141 = vadd.f32 0.0, %v140
    %142 = vdwg.mxu0
    %v144 = vsel %vm113, %v90, 0
    %v147 = vsel %vm113, %v99, 0
    %v150 = vsel %vm113, %v100, 0
    %152 = vmatpush.xpose.msra.mxu0 0.0
    %153 = vmatpush.xpose.msra.mxu0 0.0
    %154 = vmatpush.xpose.msra.mxu0 0.0
    %155 = vmatpush.xpose.msra.mxu0 0.0
    %156 = vmatpush.xpose.msra.mxu0 0.0
    %157 = vmatpush.xpose.msra.mxu0 0.0
    %158 = vmatpush.xpose.msra.mxu0 0.0
    %159 = vmatpush.xpose.msra.mxu0 0.0
    %160 = vmatpush.xpose.msra.mxu0 0.0
    %161 = vmatpush.xpose.msra.mxu0 0.0
    %162 = vmatpush.xpose.msra.mxu0 0.0
    %163 = vmatpush.xpose.msra.mxu0 0.0
    %164 = vmatpush.xpose.msra.mxu0 0.0
    %165 = vmatpush.xpose.msra.mxu0 0.0
    %166 = vmatpush.xpose.msra.mxu0 %v150
    %167 = vmatpush.xpose.msra.mxu0 %v147
    %168 = vmatmul.f32.gmra.mxu0 %v144
    %v169 = vpop.f32.mrf.mxu0
    %v170 = vadd.f32 0.0, %v169
    %171 = vdwg.mxu0
    %v173 = vsel %vm113, %v91, 0
    %v176 = vsel %vm113, %v101, 0
    %v179 = vsel %vm113, %v102, 0
    %181 = vmatpush.xpose.msra.mxu0 0.0
    %182 = vmatpush.xpose.msra.mxu0 0.0
    %183 = vmatpush.xpose.msra.mxu0 0.0
    %184 = vmatpush.xpose.msra.mxu0 0.0
    %185 = vmatpush.xpose.msra.mxu0 0.0
    %186 = vmatpush.xpose.msra.mxu0 0.0
    %187 = vmatpush.xpose.msra.mxu0 0.0
    %188 = vmatpush.xpose.msra.mxu0 0.0
    %189 = vmatpush.xpose.msra.mxu0 0.0
    %190 = vmatpush.xpose.msra.mxu0 0.0
    %191 = vmatpush.xpose.msra.mxu0 0.0
    %192 = vmatpush.xpose.msra.mxu0 0.0
    %193 = vmatpush.xpose.msra.mxu0 0.0
    %194 = vmatpush.xpose.msra.mxu0 0.0
    %195 = vmatpush.xpose.msra.mxu0 %v179
    %196 = vmatpush.xpose.msra.mxu0 %v176
    %197 = vmatmul.f32.gmra.mxu0 %v173
    %v198 = vpop.f32.mrf.mxu0
    %v199 = vadd.f32 0.0, %v198
    %200 = vdwg.mxu0
    %v202 = vsel %vm113, %v92, 0
    %v205 = vsel %vm113, %v103, 0
    %v208 = vsel %vm113, %v104, 0
    %210 = vmatpush.xpose.msra.mxu0 0.0
    %211 = vmatpush.xpose.msra.mxu0 0.0
    %212 = vmatpush.xpose.msra.mxu0 0.0
    %213 = vmatpush.xpose.msra.mxu0 0.0
    %214 = vmatpush.xpose.msra.mxu0 0.0
    %215 = vmatpush.xpose.msra.mxu0 0.0
    %216 = vmatpush.xpose.msra.mxu0 0.0
    %217 = vmatpush.xpose.msra.mxu0 0.0
    %218 = vmatpush.xpose.msra.mxu0 0.0
    %219 = vmatpush.xpose.msra.mxu0 0.0
    %220 = vmatpush.xpose.msra.mxu0 0.0
    %221 = vmatpush.xpose.msra.mxu0 0.0
    %222 = vmatpush.xpose.msra.mxu0 0.0
    %223 = vmatpush.xpose.msra.mxu0 0.0
    %224 = vmatpush.xpose.msra.mxu0 %v208
    %225 = vmatpush.xpose.msra.mxu0 %v205
    %226 = vmatmul.f32.gmra.mxu0 %v202
    %v227 = vpop.f32.mrf.mxu0
    %v228 = vadd.f32 0.0, %v227
    %229 = vdwg.mxu0
    %v231 = vsel %vm113, %v93, 0
    %v234 = vsel %vm113, %v105, 0
    %v237 = vsel %vm113, %v106, 0
    %239 = vmatpush.xpose.msra.mxu0 0.0
    %240 = vmatpush.xpose.msra.mxu0 0.0
    %241 = vmatpush.xpose.msra.mxu0 0.0
    %242 = vmatpush.xpose.msra.mxu0 0.0
    %243 = vmatpush.xpose.msra.mxu0 0.0
    %244 = vmatpush.xpose.msra.mxu0 0.0
    %245 = vmatpush.xpose.msra.mxu0 0.0
    %246 = vmatpush.xpose.msra.mxu0 0.0
    %247 = vmatpush.xpose.msra.mxu0 0.0
    %248 = vmatpush.xpose.msra.mxu0 0.0
    %249 = vmatpush.xpose.msra.mxu0 0.0
    %250 = vmatpush.xpose.msra.mxu0 0.0
    %251 = vmatpush.xpose.msra.mxu0 0.0
    %252 = vmatpush.xpose.msra.mxu0 0.0
    %253 = vmatpush.xpose.msra.mxu0 %v237
    %254 = vmatpush.xpose.msra.mxu0 %v234
    %255 = vmatmul.f32.gmra.mxu0 %v231
    %v256 = vpop.f32.mrf.mxu0
    %v257 = vadd.f32 0.0, %v256
    %258 = vdwg.mxu0
    %v260 = vsel %vm113, %v94, 0
    %v263 = vsel %vm113, %v107, 0
    %v266 = vsel %vm113, %v108, 0
    %268 = vmatpush.xpose.msra.mxu0 0.0
    %269 = vmatpush.xpose.msra.mxu0 0.0
    %270 = vmatpush.xpose.msra.mxu0 0.0
    %271 = vmatpush.xpose.msra.mxu0 0.0
    %272 = vmatpush.xpose.msra.mxu0 0.0
    %273 = vmatpush.xpose.msra.mxu0 0.0
    %274 = vmatpush.xpose.msra.mxu0 0.0
    %275 = vmatpush.xpose.msra.mxu0 0.0
    %276 = vmatpush.xpose.msra.mxu0 0.0
    %277 = vmatpush.xpose.msra.mxu0 0.0
    %278 = vmatpush.xpose.msra.mxu0 0.0
    %279 = vmatpush.xpose.msra.mxu0 0.0
    %280 = vmatpush.xpose.msra.mxu0 0.0
    %281 = vmatpush.xpose.msra.mxu0 0.0
    %282 = vmatpush.xpose.msra.mxu0 %v266
    %283 = vmatpush.xpose.msra.mxu0 %v263
    %284 = vmatmul.f32.gmra.mxu0 %v260
    %v285 = vpop.f32.mrf.mxu0
    %v286 = vadd.f32 0.0, %v285
    %287 = vdwg.mxu0
    %v289 = vsel %vm113, %v95, 0
    %v292 = vsel %vm113, %v109, 0
    %v295 = vsel %vm113, %v110, 0
    %297 = vmatpush.xpose.msra.mxu0 0.0
    %298 = vmatpush.xpose.msra.mxu0 0.0
    %299 = vmatpush.xpose.msra.mxu0 0.0
    %300 = vmatpush.xpose.msra.mxu0 0.0
    %301 = vmatpush.xpose.msra.mxu0 0.0
    %302 = vmatpush.xpose.msra.mxu0 0.0
    %303 = vmatpush.xpose.msra.mxu0 0.0
    %304 = vmatpush.xpose.msra.mxu0 0.0
    %305 = vmatpush.xpose.msra.mxu0 0.0
    %306 = vmatpush.xpose.msra.mxu0 0.0
    %307 = vmatpush.xpose.msra.mxu0 0.0
    %308 = vmatpush.xpose.msra.mxu0 0.0
    %309 = vmatpush.xpose.msra.mxu0 0.0
    %310 = vmatpush.xpose.msra.mxu0 0.0
    %311 = vmatpush.xpose.msra.mxu0 %v295
    %312 = vmatpush.xpose.msra.mxu0 %v292
    %313 = vmatmul.f32.gmra.mxu0 %v289
    %v314 = vpop.f32.mrf.mxu0
    %v315 = vadd.f32 0.0, %v314
    %316 = vdwg.mxu0
    %v318 = vsel %vm113, %v96, 0
    %v321 = vsel %vm113, %v111, 0
    %v324 = vsel %vm113, %v112, 0
    %326 = vmatpush.xpose.msra.mxu0 0.0
    %327 = vmatpush.xpose.msra.mxu0 0.0
    %328 = vmatpush.xpose.msra.mxu0 0.0
    %329 = vmatpush.xpose.msra.mxu0 0.0
    %330 = vmatpush.xpose.msra.mxu0 0.0
    %331 = vmatpush.xpose.msra.mxu0 0.0
    %332 = vmatpush.xpose.msra.mxu0 0.0
    %333 = vmatpush.xpose.msra.mxu0 0.0
    %334 = vmatpush.xpose.msra.mxu0 0.0
    %335 = vmatpush.xpose.msra.mxu0 0.0
    %336 = vmatpush.xpose.msra.mxu0 0.0
    %337 = vmatpush.xpose.msra.mxu0 0.0
    %338 = vmatpush.xpose.msra.mxu0 0.0
    %339 = vmatpush.xpose.msra.mxu0 0.0
    %340 = vmatpush.xpose.msra.mxu0 %v324
    %341 = vmatpush.xpose.msra.mxu0 %v321
    %342 = vmatmul.f32.gmra.mxu0 %v318
    %v343 = vpop.f32.mrf.mxu0
    %v344 = vadd.f32 0.0, %v343
    %345 = vdwg.mxu0
    %v346 = vld [vmem:[%s4] sm:$0xf]
    %v347 = vld [vmem:[%s5] sm:$0xf]
    %v348 = vld [vmem:[%s7] sm:$0x3]
    %v350 = vsel %vm55, %v348, 0
    %v353 = vsel %vm62, %v346, 0
    %355 = vmatpush.msra.mxu0 0.0
    %356 = vmatpush.msra.mxu0 0.0
    %357 = vmatpush.msra.mxu0 0.0
    %358 = vmatpush.msra.mxu0 0.0
    %359 = vmatpush.msra.mxu0 0.0
    %360 = vmatpush.msra.mxu0 0.0
    %361 = vmatpush.msra.mxu0 0.0
    %362 = vmatpush.msra.mxu0 0.0
    %363 = vmatpush.msra.mxu0 0.0
    %364 = vmatpush.msra.mxu0 0.0
    %365 = vmatpush.msra.mxu0 0.0
    %366 = vmatpush.msra.mxu0 0.0
    %367 = vmatpush.msra.mxu0 0.0
    %368 = vmatpush.msra.mxu0 0.0
    %369 = vmatpush.msra.mxu0 0.0
    %370 = vmatpush.msra.mxu0 %v353
    %371 = vmatmul.f32.gmra.mxu0 %v350
    %v372 = vpop.f32.mrf.mxu0
    %v373 = vadd.f32 0.0, %v372
    %374 = vdwg.mxu0
    %v375 = vadd.f32 %v84, %v373
    %v376 = vxor.u32 %v375, 2147483648
    %v377 = vmul.f32 %v376, 1.442695
    %v378 = vpow.pop %v377
    %v379 = vadd.f32 %v378, 1.0
    %v380 = vrcp.pop %v379
    %v381 = vmul.f32 %v379, %v380
    %v382 = vsub.f32 1.0, %v381
    %v383 = vmul.f32 %v380, %v382
    %v384 = vadd.f32 %v380, %v383
    %vm385 = vweird.f32 %v379
    %vm386 = vweird.f32 %v380
    %vm387 = vmor %vm385, %vm386
    %v388 = vsel %vm387, %v380, %v384
    %v389 = vand.u32 2147483647, %v379
    %vm390 = vcmp.eq.f32.partialorder %v389, 8.507059e+37
    %v391 = vand.u32 %v379, 2147483648
    %v392 = vor.u32 1.1754944e-38, %v391
    %v393 = vsel %vm390, %v392, %v388
    %v394 = vmul.f32 1.0, %v393
    %395 = vrot.lane.b32.xlu0 %v348, 4
    %v396 = vpop.permute.xlu0 %395
    %v398 = vmul.f32 %v394, %v396
    %400 = vrot.lane.b32.xlu0 %v398, 124
    %v401 = vpop.permute.xlu0 %400
    %v402 = vsel %vm55, %v401, 0
    %v405 = vsel %vm62, %v347, 0
    %407 = vmatpush.msra.mxu0 0.0
    %408 = vmatpush.msra.mxu0 0.0
    %409 = vmatpush.msra.mxu0 0.0
    %410 = vmatpush.msra.mxu0 0.0
    %411 = vmatpush.msra.mxu0 0.0
    %412 = vmatpush.msra.mxu0 0.0
    %413 = vmatpush.msra.mxu0 0.0
    %414 = vmatpush.msra.mxu0 0.0
    %415 = vmatpush.msra.mxu0 0.0
    %416 = vmatpush.msra.mxu0 0.0
    %417 = vmatpush.msra.mxu0 0.0
    %418 = vmatpush.msra.mxu0 0.0
    %419 = vmatpush.msra.mxu0 0.0
    %420 = vmatpush.msra.mxu0 0.0
    %421 = vmatpush.msra.mxu0 0.0
    %422 = vmatpush.msra.mxu0 %v405
    %423 = vmatmul.f32.gmra.mxu0 %v402
    %v424 = vpop.f32.mrf.mxu0
    %v425 = vadd.f32 0.0, %v424
    %426 = vdwg.mxu0
    %428 = vrot.lane.b32.xlu0 %v425, 8
    %v429 = vpop.permute.xlu0 %428
    %v431 = vadd.f32 %v84, %v429
    %v432 = vtanh.pop %v431
    %v433 = vsub.f32 1.0, %v394
    %v434 = vmul.f32 %v433, %v348
    %436 = vrot.lane.b32.xlu0 %v432, 120
    %v437 = vpop.permute.xlu0 %436
    %v439 = vmul.f32 %v394, %v437
    %v440 = vadd.f32 %v434, %v439
    %s441 = sld [smem:[#allocation3]]
    %v442 = vstv %s441
    %v443 = vmul.f32 %v442, %v440
    %s444 = sld [smem:[#allocation3 + $0x1]]
    %v445 = vstv %s444
    %v446 = vmul.f32 %v445, %v440
    %v448 = vrot.slane %v446, 1
    %v450 = vadd.f32 %v443, %v448
    %v452 = vsel %vm55, %v440, 0
    %454 = vmatpush.msra.mxu0 0.0
    %455 = vmatpush.msra.mxu0 0.0
    %456 = vmatpush.msra.mxu0 0.0
    %457 = vmatpush.msra.mxu0 0.0
    %458 = vmatpush.msra.mxu0 0.0
    %459 = vmatpush.msra.mxu0 0.0
    %460 = vmatpush.msra.mxu0 0.0
    %461 = vmatpush.msra.mxu0 0.0
    %462 = vmatpush.msra.mxu0 0.0
    %463 = vmatpush.msra.mxu0 0.0
    %464 = vmatpush.msra.mxu0 0.0
    %465 = vmatpush.msra.mxu0 0.0
    %466 = vmatpush.msra.mxu0 0.0
    %467 = vmatpush.msra.mxu0 0.0
    %468 = vmatpush.msra.mxu0 0.0
    %469 = vmatpush.msra.mxu0 %v353
    %470 = vmatmul.f32.gmra.mxu0 %v452
    %v471 = vpop.f32.mrf.mxu0
    %v472 = vadd.f32 0.0, %v471
    %473 = vdwg.mxu0
    %v475 = vrot.slane %v472, 6
    %v477 = vadd.f32 %v84, %v475
    %v478 = vxor.u32 %v477, 2147483648
    %v479 = vmul.f32 %v478, 1.442695
    %v480 = vpow.pop %v479
    %v481 = vadd.f32 %v480, 1.0
    %v482 = vrcp.pop %v481
    %v483 = vmul.f32 %v481, %v482
    %v484 = vsub.f32 1.0, %v483
    %v485 = vmul.f32 %v482, %v484
    %v486 = vadd.f32 %v482, %v485
    %vm487 = vweird.f32 %v481
    %vm488 = vweird.f32 %v482
    %vm489 = vmor %vm487, %vm488
    %v490 = vsel %vm489, %v482, %v486
    %v491 = vand.u32 2147483647, %v481
    %vm492 = vcmp.eq.f32.partialorder %v491, 8.507059e+37
    %v493 = vand.u32 %v481, 2147483648
    %v494 = vor.u32 1.1754944e-38, %v493
    %v495 = vsel %vm492, %v494, %v490
    %v496 = vmul.f32 1.0, %v495
    %v497 = vrot.slane %v440, 6
    %498 = vrot.lane.b32.xlu0 %v497, 4
    %v499 = vpop.permute.xlu0 %498
    %v501 = vmul.f32 %v496, %v499
    %v503 = vrot.slane %v501, 2
    %504 = vrot.lane.b32.xlu0 %v503, 124
    %v505 = vpop.permute.xlu0 %504
    %v506 = vsel %vm55, %v505, 0
    %508 = vmatpush.msra.mxu0 0.0
    %509 = vmatpush.msra.mxu0 0.0
    %510 = vmatpush.msra.mxu0 0.0
    %511 = vmatpush.msra.mxu0 0.0
    %512 = vmatpush.msra.mxu0 0.0
    %513 = vmatpush.msra.mxu0 0.0
    %514 = vmatpush.msra.mxu0 0.0
    %515 = vmatpush.msra.mxu0 0.0
    %516 = vmatpush.msra.mxu0 0.0
    %517 = vmatpush.msra.mxu0 0.0
    %518 = vmatpush.msra.mxu0 0.0
    %519 = vmatpush.msra.mxu0 0.0
    %520 = vmatpush.msra.mxu0 0.0
    %521 = vmatpush.msra.mxu0 0.0
    %522 = vmatpush.msra.mxu0 0.0
    %523 = vmatpush.msra.mxu0 %v405
    %524 = vmatmul.f32.gmra.mxu0 %v506
    %v525 = vpop.f32.mrf.mxu0
    %v526 = vadd.f32 0.0, %v525
    %527 = vdwg.mxu0
    %v529 = vrot.slane %v526, 6
    %530 = vrot.lane.b32.xlu0 %v529, 8
    %v531 = vpop.permute.xlu0 %530
    %v533 = vadd.f32 %v84, %v531
    %v534 = vtanh.pop %v533
    %v535 = vsub.f32 1.0, %v496
    %v537 = vmul.f32 %v535, %v497
    %539 = vrot.lane.b32.xlu0 %v534, 120
    %v540 = vpop.permute.xlu0 %539
    %v542 = vmul.f32 %v496, %v540
    %v543 = vadd.f32 %v537, %v542
    %v544 = vmul.f32 %v442, %v543
    %v545 = vmul.f32 %v445, %v543
    %v547 = vrot.slane %v545, 1
    %v549 = vadd.f32 %v544, %v547
    %v551 = vrot.slane %v543, 2
    %v552 = vsel %vm55, %v551, 0
    %554 = vmatpush.msra.mxu0 0.0
    %555 = vmatpush.msra.mxu0 0.0
    %556 = vmatpush.msra.mxu0 0.0
    %557 = vmatpush.msra.mxu0 0.0
    %558 = vmatpush.msra.mxu0 0.0
    %559 = vmatpush.msra.mxu0 0.0
    %560 = vmatpush.msra.mxu0 0.0
    %561 = vmatpush.msra.mxu0 0.0
    %562 = vmatpush.msra.mxu0 0.0
    %563 = vmatpush.msra.mxu0 0.0
    %564 = vmatpush.msra.mxu0 0.0
    %565 = vmatpush.msra.mxu0 0.0
    %566 = vmatpush.msra.mxu0 0.0
    %567 = vmatpush.msra.mxu0 0.0
    %568 = vmatpush.msra.mxu0 0.0
    %569 = vmatpush.msra.mxu0 %v353
    %570 = vmatmul.f32.gmra.mxu0 %v552
    %v571 = vpop.f32.mrf.mxu0
    %v572 = vadd.f32 0.0, %v571
    %573 = vdwg.mxu0
    %v575 = vrot.slane %v572, 4
    %v577 = vadd.f32 %v84, %v575
    %v578 = vxor.u32 %v577, 2147483648
    %v579 = vmul.f32 %v578, 1.442695
    %v580 = vpow.pop %v579
    %v581 = vadd.f32 %v580, 1.0
    %v582 = vrcp.pop %v581
    %v583 = vmul.f32 %v581, %v582
    %v584 = vsub.f32 1.0, %v583
    %v585 = vmul.f32 %v582, %v584
    %v586 = vadd.f32 %v582, %v585
    %vm587 = vweird.f32 %v581
    %vm588 = vweird.f32 %v582
    %vm589 = vmor %vm587, %vm588
    %v590 = vsel %vm589, %v582, %v586
    %v591 = vand.u32 2147483647, %v581
    %vm592 = vcmp.eq.f32.partialorder %v591, 8.507059e+37
    %v593 = vand.u32 %v581, 2147483648
    %v594 = vor.u32 1.1754944e-38, %v593
    %v595 = vsel %vm592, %v594, %v590
    %v596 = vmul.f32 1.0, %v595
    %v597 = vrot.slane %v543, 6
    %598 = vrot.lane.b32.xlu0 %v597, 4
    %v599 = vpop.permute.xlu0 %598
    %v601 = vmul.f32 %v596, %v599
    %v603 = vrot.slane %v601, 4
    %604 = vrot.lane.b32.xlu0 %v603, 124
    %v605 = vpop.permute.xlu0 %604
    %v606 = vsel %vm55, %v605, 0
    %608 = vmatpush.msra.mxu0 0.0
    %609 = vmatpush.msra.mxu0 0.0
    %610 = vmatpush.msra.mxu0 0.0
    %611 = vmatpush.msra.mxu0 0.0
    %612 = vmatpush.msra.mxu0 0.0
    %613 = vmatpush.msra.mxu0 0.0
    %614 = vmatpush.msra.mxu0 0.0
    %615 = vmatpush.msra.mxu0 0.0
    %616 = vmatpush.msra.mxu0 0.0
    %617 = vmatpush.msra.mxu0 0.0
    %618 = vmatpush.msra.mxu0 0.0
    %619 = vmatpush.msra.mxu0 0.0
    %620 = vmatpush.msra.mxu0 0.0
    %621 = vmatpush.msra.mxu0 0.0
    %622 = vmatpush.msra.mxu0 0.0
    %623 = vmatpush.msra.mxu0 %v405
    %624 = vmatmul.f32.gmra.mxu0 %v606
    %v625 = vpop.f32.mrf.mxu0
    %v626 = vadd.f32 0.0, %v625
    %627 = vdwg.mxu0
    %v629 = vrot.slane %v626, 4
    %630 = vrot.lane.b32.xlu0 %v629, 8
    %v631 = vpop.permute.xlu0 %630
    %v633 = vadd.f32 %v84, %v631
    %v634 = vtanh.pop %v633
    %v635 = vsub.f32 1.0, %v596
    %v637 = vmul.f32 %v635, %v597
    %639 = vrot.lane.b32.xlu0 %v634, 120
    %v640 = vpop.permute.xlu0 %639
    %v642 = vmul.f32 %v596, %v640
    %v643 = vadd.f32 %v637, %v642
    %v644 = vmul.f32 %v442, %v643
    %v645 = vmul.f32 %v445, %v643
    %v647 = vrot.slane %v645, 1
    %v649 = vadd.f32 %v644, %v647
    %v651 = vrot.slane %v643, 4
    %v652 = vsel %vm55, %v651, 0
    %654 = vmatpush.msra.mxu0 0.0
    %655 = vmatpush.msra.mxu0 0.0
    %656 = vmatpush.msra.mxu0 0.0
    %657 = vmatpush.msra.mxu0 0.0
    %658 = vmatpush.msra.mxu0 0.0
    %659 = vmatpush.msra.mxu0 0.0
    %660 = vmatpush.msra.mxu0 0.0
    %661 = vmatpush.msra.mxu0 0.0
    %662 = vmatpush.msra.mxu0 0.0
    %663 = vmatpush.msra.mxu0 0.0
    %664 = vmatpush.msra.mxu0 0.0
    %665 = vmatpush.msra.mxu0 0.0
    %666 = vmatpush.msra.mxu0 0.0
    %667 = vmatpush.msra.mxu0 0.0
    %668 = vmatpush.msra.mxu0 0.0
    %669 = vmatpush.msra.mxu0 %v353
    %670 = vmatmul.f32.gmra.mxu0 %v652
    %v671 = vpop.f32.mrf.mxu0
    %v672 = vadd.f32 0.0, %v671
    %673 = vdwg.mxu0
    %v675 = vrot.slane %v672, 2
    %v677 = vadd.f32 %v84, %v675
    %v678 = vxor.u32 %v677, 2147483648
    %v679 = vmul.f32 %v678, 1.442695
    %v680 = vpow.pop %v679
    %v681 = vadd.f32 %v680, 1.0
    %v682 = vrcp.pop %v681
    %v683 = vmul.f32 %v681, %v682
    %v684 = vsub.f32 1.0, %v683
    %v685 = vmul.f32 %v682, %v684
    %v686 = vadd.f32 %v682, %v685
    %vm687 = vweird.f32 %v681
    %vm688 = vweird.f32 %v682
    %vm689 = vmor %vm687, %vm688
    %v690 = vsel %vm689, %v682, %v686
    %v691 = vand.u32 2147483647, %v681
    %vm692 = vcmp.eq.f32.partialorder %v691, 8.507059e+37
    %v693 = vand.u32 %v681, 2147483648
    %v694 = vor.u32 1.1754944e-38, %v693
    %v695 = vsel %vm692, %v694, %v690
    %v696 = vmul.f32 1.0, %v695
    %v697 = vrot.slane %v643, 6
    %698 = vrot.lane.b32.xlu0 %v697, 4
    %v699 = vpop.permute.xlu0 %698
    %v701 = vmul.f32 %v696, %v699
    %v703 = vrot.slane %v701, 6
    %704 = vrot.lane.b32.xlu0 %v703, 124
    %v705 = vpop.permute.xlu0 %704
    %v706 = vsel %vm55, %v705, 0
    %708 = vmatpush.msra.mxu0 0.0
    %709 = vmatpush.msra.mxu0 0.0
    %710 = vmatpush.msra.mxu0 0.0
    %711 = vmatpush.msra.mxu0 0.0
    %712 = vmatpush.msra.mxu0 0.0
    %713 = vmatpush.msra.mxu0 0.0
    %714 = vmatpush.msra.mxu0 0.0
    %715 = vmatpush.msra.mxu0 0.0
    %716 = vmatpush.msra.mxu0 0.0
    %717 = vmatpush.msra.mxu0 0.0
    %718 = vmatpush.msra.mxu0 0.0
    %719 = vmatpush.msra.mxu0 0.0
    %720 = vmatpush.msra.mxu0 0.0
    %721 = vmatpush.msra.mxu0 0.0
    %722 = vmatpush.msra.mxu0 0.0
    %723 = vmatpush.msra.mxu0 %v405
    %724 = vmatmul.f32.gmra.mxu0 %v706
    %v725 = vpop.f32.mrf.mxu0
    %v726 = vadd.f32 0.0, %v725
    %727 = vdwg.mxu0
    %v729 = vrot.slane %v726, 2
    %730 = vrot.lane.b32.xlu0 %v729, 8
    %v731 = vpop.permute.xlu0 %730
    %v733 = vadd.f32 %v84, %v731
    %v734 = vtanh.pop %v733
    %v735 = vsub.f32 1.0, %v696
    %v737 = vmul.f32 %v735, %v697
    %739 = vrot.lane.b32.xlu0 %v734, 120
    %v740 = vpop.permute.xlu0 %739
    %v742 = vmul.f32 %v696, %v740
    %v743 = vadd.f32 %v737, %v742
    %v744 = vmul.f32 %v442, %v743
    %v745 = vmul.f32 %v445, %v743
    %v747 = vrot.slane %v745, 1
    %v749 = vadd.f32 %v744, %v747
    %v751 = vrot.slane %v743, 6
    %v752 = vsel %vm55, %v751, 0
    %754 = vmatpush.msra.mxu0 0.0
    %755 = vmatpush.msra.mxu0 0.0
    %756 = vmatpush.msra.mxu0 0.0
    %757 = vmatpush.msra.mxu0 0.0
    %758 = vmatpush.msra.mxu0 0.0
    %759 = vmatpush.msra.mxu0 0.0
    %760 = vmatpush.msra.mxu0 0.0
    %761 = vmatpush.msra.mxu0 0.0
    %762 = vmatpush.msra.mxu0 0.0
    %763 = vmatpush.msra.mxu0 0.0
    %764 = vmatpush.msra.mxu0 0.0
    %765 = vmatpush.msra.mxu0 0.0
    %766 = vmatpush.msra.mxu0 0.0
    %767 = vmatpush.msra.mxu0 0.0
    %768 = vmatpush.msra.mxu0 0.0
    %769 = vmatpush.msra.mxu0 %v353
    %770 = vmatmul.f32.gmra.mxu0 %v752
    %v771 = vpop.f32.mrf.mxu0
    %v772 = vadd.f32 0.0, %v771
    %773 = vdwg.mxu0
    %v774 = vadd.f32 %v87, %v772
    %v775 = vxor.u32 %v774, 2147483648
    %v776 = vmul.f32 %v775, 1.442695
    %v777 = vpow.pop %v776
    %v778 = vadd.f32 %v777, 1.0
    %v779 = vrcp.pop %v778
    %v780 = vmul.f32 %v778, %v779
    %v781 = vsub.f32 1.0, %v780
    %v782 = vmul.f32 %v779, %v781
    %v783 = vadd.f32 %v779, %v782
    %vm784 = vweird.f32 %v778
    %vm785 = vweird.f32 %v779
    %vm786 = vmor %vm784, %vm785
    %v787 = vsel %vm786, %v779, %v783
    %v788 = vand.u32 2147483647, %v778
    %vm789 = vcmp.eq.f32.partialorder %v788, 8.507059e+37
    %v790 = vand.u32 %v778, 2147483648
    %v791 = vor.u32 1.1754944e-38, %v790
    %v792 = vsel %vm789, %v791, %v787
    %v793 = vmul.f32 1.0, %v792
    %794 = vrot.lane.b32.xlu0 %v751, 4
    %v795 = vpop.permute.xlu0 %794
    %v797 = vmul.f32 %v793, %v795
    %799 = vrot.lane.b32.xlu0 %v797, 124
    %v800 = vpop.permute.xlu0 %799
    %v801 = vsel %vm55, %v800, 0
    %803 = vmatpush.msra.mxu0 0.0
    %804 = vmatpush.msra.mxu0 0.0
    %805 = vmatpush.msra.mxu0 0.0
    %806 = vmatpush.msra.mxu0 0.0
    %807 = vmatpush.msra.mxu0 0.0
    %808 = vmatpush.msra.mxu0 0.0
    %809 = vmatpush.msra.mxu0 0.0
    %810 = vmatpush.msra.mxu0 0.0
    %811 = vmatpush.msra.mxu0 0.0
    %812 = vmatpush.msra.mxu0 0.0
    %813 = vmatpush.msra.mxu0 0.0
    %814 = vmatpush.msra.mxu0 0.0
    %815 = vmatpush.msra.mxu0 0.0
    %816 = vmatpush.msra.mxu0 0.0
    %817 = vmatpush.msra.mxu0 0.0
    %818 = vmatpush.msra.mxu0 %v405
    %819 = vmatmul.f32.gmra.mxu0 %v801
    %v820 = vpop.f32.mrf.mxu0
    %v821 = vadd.f32 0.0, %v820
    %822 = vdwg.mxu0
    %824 = vrot.lane.b32.xlu0 %v821, 8
    %v825 = vpop.permute.xlu0 %824
    %v827 = vadd.f32 %v87, %v825
    %v828 = vtanh.pop %v827
    %v829 = vsub.f32 1.0, %v793
    %v831 = vmul.f32 %v829, %v751
    %833 = vrot.lane.b32.xlu0 %v828, 120
    %v834 = vpop.permute.xlu0 %833
    %v836 = vmul.f32 %v793, %v834
    %v837 = vadd.f32 %v831, %v836
    %v838 = vmul.f32 %v442, %v837
    %v839 = vmul.f32 %v445, %v837
    %v841 = vrot.slane %v839, 1
    %v843 = vadd.f32 %v838, %v841
    %v845 = vsel %vm55, %v837, 0
    %847 = vmatpush.msra.mxu0 0.0
    %848 = vmatpush.msra.mxu0 0.0
    %849 = vmatpush.msra.mxu0 0.0
    %850 = vmatpush.msra.mxu0 0.0
    %851 = vmatpush.msra.mxu0 0.0
    %852 = vmatpush.msra.mxu0 0.0
    %853 = vmatpush.msra.mxu0 0.0
    %854 = vmatpush.msra.mxu0 0.0
    %855 = vmatpush.msra.mxu0 0.0
    %856 = vmatpush.msra.mxu0 0.0
    %857 = vmatpush.msra.mxu0 0.0
    %858 = vmatpush.msra.mxu0 0.0
    %859 = vmatpush.msra.mxu0 0.0
    %860 = vmatpush.msra.mxu0 0.0
    %861 = vmatpush.msra.mxu0 0.0
    %862 = vmatpush.msra.mxu0 %v353
    %863 = vmatmul.f32.gmra.mxu0 %v845
    %v864 = vpop.f32.mrf.mxu0
    %v865 = vadd.f32 0.0, %v864
    %866 = vdwg.mxu0
    %v868 = vrot.slane %v865, 6
    %v870 = vadd.f32 %v87, %v868
    %v871 = vxor.u32 %v870, 2147483648
    %v872 = vmul.f32 %v871, 1.442695
    %v873 = vpow.pop %v872
    %v874 = vadd.f32 %v873, 1.0
    %v875 = vrcp.pop %v874
    %v876 = vmul.f32 %v874, %v875
    %v877 = vsub.f32 1.0, %v876
    %v878 = vmul.f32 %v875, %v877
    %v879 = vadd.f32 %v875, %v878
    %vm880 = vweird.f32 %v874
    %vm881 = vweird.f32 %v875
    %vm882 = vmor %vm880, %vm881
    %v883 = vsel %vm882, %v875, %v879
    %v884 = vand.u32 2147483647, %v874
    %vm885 = vcmp.eq.f32.partialorder %v884, 8.507059e+37
    %v886 = vand.u32 %v874, 2147483648
    %v887 = vor.u32 1.1754944e-38, %v886
    %v888 = vsel %vm885, %v887, %v883
    %v889 = vmul.f32 1.0, %v888
    %v890 = vrot.slane %v837, 6
    %891 = vrot.lane.b32.xlu0 %v890, 4
    %v892 = vpop.permute.xlu0 %891
    %v894 = vmul.f32 %v889, %v892
    %v896 = vrot.slane %v894, 2
    %897 = vrot.lane.b32.xlu0 %v896, 124
    %v898 = vpop.permute.xlu0 %897
    %v899 = vsel %vm55, %v898, 0
    %901 = vmatpush.msra.mxu0 0.0
    %902 = vmatpush.msra.mxu0 0.0
    %903 = vmatpush.msra.mxu0 0.0
    %904 = vmatpush.msra.mxu0 0.0
    %905 = vmatpush.msra.mxu0 0.0
    %906 = vmatpush.msra.mxu0 0.0
    %907 = vmatpush.msra.mxu0 0.0
    %908 = vmatpush.msra.mxu0 0.0
    %909 = vmatpush.msra.mxu0 0.0
    %910 = vmatpush.msra.mxu0 0.0
    %911 = vmatpush.msra.mxu0 0.0
    %912 = vmatpush.msra.mxu0 0.0
    %913 = vmatpush.msra.mxu0 0.0
    %914 = vmatpush.msra.mxu0 0.0
    %915 = vmatpush.msra.mxu0 0.0
    %916 = vmatpush.msra.mxu0 %v405
    %917 = vmatmul.f32.gmra.mxu0 %v899
    %v918 = vpop.f32.mrf.mxu0
    %v919 = vadd.f32 0.0, %v918
    %920 = vdwg.mxu0
    %v922 = vrot.slane %v919, 6
    %923 = vrot.lane.b32.xlu0 %v922, 8
    %v924 = vpop.permute.xlu0 %923
    %v926 = vadd.f32 %v87, %v924
    %v927 = vtanh.pop %v926
    %v928 = vsub.f32 1.0, %v889
    %v930 = vmul.f32 %v928, %v890
    %932 = vrot.lane.b32.xlu0 %v927, 120
    %v933 = vpop.permute.xlu0 %932
    %v935 = vmul.f32 %v889, %v933
    %v936 = vadd.f32 %v930, %v935
    %v937 = vmul.f32 %v442, %v936
    %v938 = vmul.f32 %v445, %v936
    %v940 = vrot.slane %v938, 1
    %v942 = vadd.f32 %v937, %v940
    %v944 = vrot.slane %v936, 2
    %v945 = vsel %vm55, %v944, 0
    %947 = vmatpush.msra.mxu0 0.0
    %948 = vmatpush.msra.mxu0 0.0
    %949 = vmatpush.msra.mxu0 0.0
    %950 = vmatpush.msra.mxu0 0.0
    %951 = vmatpush.msra.mxu0 0.0
    %952 = vmatpush.msra.mxu0 0.0
    %953 = vmatpush.msra.mxu0 0.0
    %954 = vmatpush.msra.mxu0 0.0
    %955 = vmatpush.msra.mxu0 0.0
    %956 = vmatpush.msra.mxu0 0.0
    %957 = vmatpush.msra.mxu0 0.0
    %958 = vmatpush.msra.mxu0 0.0
    %959 = vmatpush.msra.mxu0 0.0
    %960 = vmatpush.msra.mxu0 0.0
    %961 = vmatpush.msra.mxu0 0.0
    %962 = vmatpush.msra.mxu0 %v353
    %963 = vmatmul.f32.gmra.mxu0 %v945
    %v964 = vpop.f32.mrf.mxu0
    %v965 = vadd.f32 0.0, %v964
    %966 = vdwg.mxu0
    %v968 = vrot.slane %v965, 4
    %v970 = vadd.f32 %v87, %v968
    %v971 = vxor.u32 %v970, 2147483648
    %v972 = vmul.f32 %v971, 1.442695
    %v973 = vpow.pop %v972
    %v974 = vadd.f32 %v973, 1.0
    %v975 = vrcp.pop %v974
    %v976 = vmul.f32 %v974, %v975
    %v977 = vsub.f32 1.0, %v976
    %v978 = vmul.f32 %v975, %v977
    %v979 = vadd.f32 %v975, %v978
    %vm980 = vweird.f32 %v974
    %vm981 = vweird.f32 %v975
    %vm982 = vmor %vm980, %vm981
    %v983 = vsel %vm982, %v975, %v979
    %v984 = vand.u32 2147483647, %v974
    %vm985 = vcmp.eq.f32.partialorder %v984, 8.507059e+37
    %v986 = vand.u32 %v974, 2147483648
    %v987 = vor.u32 1.1754944e-38, %v986
    %v988 = vsel %vm985, %v987, %v983
    %v989 = vmul.f32 1.0, %v988
    %v990 = vrot.slane %v936, 6
    %991 = vrot.lane.b32.xlu0 %v990, 4
    %v992 = vpop.permute.xlu0 %991
    %v994 = vmul.f32 %v989, %v992
    %v996 = vrot.slane %v994, 4
    %997 = vrot.lane.b32.xlu0 %v996, 124
    %v998 = vpop.permute.xlu0 %997
    %v999 = vsel %vm55, %v998, 0
    %1001 = vmatpush.msra.mxu0 0.0
    %1002 = vmatpush.msra.mxu0 0.0
    %1003 = vmatpush.msra.mxu0 0.0
    %1004 = vmatpush.msra.mxu0 0.0
    %1005 = vmatpush.msra.mxu0 0.0
    %1006 = vmatpush.msra.mxu0 0.0
    %1007 = vmatpush.msra.mxu0 0.0
    %1008 = vmatpush.msra.mxu0 0.0
    %1009 = vmatpush.msra.mxu0 0.0
    %1010 = vmatpush.msra.mxu0 0.0
    %1011 = vmatpush.msra.mxu0 0.0
    %1012 = vmatpush.msra.mxu0 0.0
    %1013 = vmatpush.msra.mxu0 0.0
    %1014 = vmatpush.msra.mxu0 0.0
    %1015 = vmatpush.msra.mxu0 0.0
    %1016 = vmatpush.msra.mxu0 %v405
    %1017 = vmatmul.f32.gmra.mxu0 %v999
    %v1018 = vpop.f32.mrf.mxu0
    %v1019 = vadd.f32 0.0, %v1018
    %1020 = vdwg.mxu0
    %v1022 = vrot.slane %v1019, 4
    %1023 = vrot.lane.b32.xlu0 %v1022, 8
    %v1024 = vpop.permute.xlu0 %1023
    %v1026 = vadd.f32 %v87, %v1024
    %v1027 = vtanh.pop %v1026
    %v1028 = vsub.f32 1.0, %v989
    %v1030 = vmul.f32 %v1028, %v990
    %1032 = vrot.lane.b32.xlu0 %v1027, 120
    %v1033 = vpop.permute.xlu0 %1032
    %v1035 = vmul.f32 %v989, %v1033
    %v1036 = vadd.f32 %v1030, %v1035
    %v1037 = vmul.f32 %v442, %v1036
    %v1038 = vmul.f32 %v445, %v1036
    %v1040 = vrot.slane %v1038, 1
    %v1042 = vadd.f32 %v1037, %v1040
    %v1044 = vrot.slane %v1036, 4
    %v1045 = vsel %vm55, %v1044, 0
    %1047 = vmatpush.msra.mxu0 0.0
    %1048 = vmatpush.msra.mxu0 0.0
    %1049 = vmatpush.msra.mxu0 0.0
    %1050 = vmatpush.msra.mxu0 0.0
    %1051 = vmatpush.msra.mxu0 0.0
    %1052 = vmatpush.msra.mxu0 0.0
    %1053 = vmatpush.msra.mxu0 0.0
    %1054 = vmatpush.msra.mxu0 0.0
    %1055 = vmatpush.msra.mxu0 0.0
    %1056 = vmatpush.msra.mxu0 0.0
    %1057 = vmatpush.msra.mxu0 0.0
    %1058 = vmatpush.msra.mxu0 0.0
    %1059 = vmatpush.msra.mxu0 0.0
    %1060 = vmatpush.msra.mxu0 0.0
    %1061 = vmatpush.msra.mxu0 0.0
    %1062 = vmatpush.msra.mxu0 %v353
    %1063 = vmatmul.f32.gmra.mxu0 %v1045
    %v1064 = vpop.f32.mrf.mxu0
    %v1065 = vadd.f32 0.0, %v1064
    %1066 = vdwg.mxu0
    %v1068 = vrot.slane %v1065, 2
    %v1070 = vadd.f32 %v87, %v1068
    %v1071 = vxor.u32 %v1070, 2147483648
    %v1072 = vmul.f32 %v1071, 1.442695
    %v1073 = vpow.pop %v1072
    %v1074 = vadd.f32 %v1073, 1.0
    %v1075 = vrcp.pop %v1074
    %v1076 = vmul.f32 %v1074, %v1075
    %v1077 = vsub.f32 1.0, %v1076
    %v1078 = vmul.f32 %v1075, %v1077
    %v1079 = vadd.f32 %v1075, %v1078
    %vm1080 = vweird.f32 %v1074
    %vm1081 = vweird.f32 %v1075
    %vm1082 = vmor %vm1080, %vm1081
    %v1083 = vsel %vm1082, %v1075, %v1079
    %v1084 = vand.u32 2147483647, %v1074
    %vm1085 = vcmp.eq.f32.partialorder %v1084, 8.507059e+37
    %v1086 = vand.u32 %v1074, 2147483648
    %v1087 = vor.u32 1.1754944e-38, %v1086
    %v1088 = vsel %vm1085, %v1087, %v1083
    %v1089 = vmul.f32 1.0, %v1088
    %v1090 = vrot.slane %v1036, 6
    %1091 = vrot.lane.b32.xlu0 %v1090, 4
    %v1092 = vpop.permute.xlu0 %1091
    %v1094 = vmul.f32 %v1089, %v1092
    %v1096 = vrot.slane %v1094, 6
    %1097 = vrot.lane.b32.xlu0 %v1096, 124
    %v1098 = vpop.permute.xlu0 %1097
    %v1099 = vsel %vm55, %v1098, 0
    %1101 = vmatpush.msra.mxu0 0.0
    %1102 = vmatpush.msra.mxu0 0.0
    %1103 = vmatpush.msra.mxu0 0.0
    %1104 = vmatpush.msra.mxu0 0.0
    %1105 = vmatpush.msra.mxu0 0.0
    %1106 = vmatpush.msra.mxu0 0.0
    %1107 = vmatpush.msra.mxu0 0.0
    %1108 = vmatpush.msra.mxu0 0.0
    %1109 = vmatpush.msra.mxu0 0.0
    %1110 = vmatpush.msra.mxu0 0.0
    %1111 = vmatpush.msra.mxu0 0.0
    %1112 = vmatpush.msra.mxu0 0.0
    %1113 = vmatpush.msra.mxu0 0.0
    %1114 = vmatpush.msra.mxu0 0.0
    %1115 = vmatpush.msra.mxu0 0.0
    %1116 = vmatpush.msra.mxu0 %v405
    %1117 = vmatmul.f32.gmra.mxu0 %v1099
    %v1118 = vpop.f32.mrf.mxu0
    %v1119 = vadd.f32 0.0, %v1118
    %1120 = vdwg.mxu0
    %v1122 = vrot.slane %v1119, 2
    %1123 = vrot.lane.b32.xlu0 %v1122, 8
    %v1124 = vpop.permute.xlu0 %1123
    %v1126 = vadd.f32 %v87, %v1124
    %v1127 = vtanh.pop %v1126
    %v1128 = vsub.f32 1.0, %v1089
    %v1130 = vmul.f32 %v1128, %v1090
    %1132 = vrot.lane.b32.xlu0 %v1127, 120
    %v1133 = vpop.permute.xlu0 %1132
    %v1135 = vmul.f32 %v1089, %v1133
    %v1136 = vadd.f32 %v1130, %v1135
    %v1137 = vmul.f32 %v442, %v1136
    %v1138 = vmul.f32 %v445, %v1136
    %v1140 = vrot.slane %v1138, 1
    %v1142 = vadd.f32 %v1137, %v1140
    %v1144 = vrot.slane %v549, 1
    %v1147 = vrot.slane %v649, 2
    %v1150 = vrot.slane %v749, 3
    %v1153 = vrot.slane %v843, 4
    %v1156 = vrot.slane %v942, 5
    %v1159 = vrot.slane %v1042, 6
    %v1162 = vrot.slane %v1142, 7
    %vm1164 = vcmask 1040384
    %v1165 = vsel %vm1164, %v450, %v1144
    %vm1166 = vcmask 1041408
    %v1167 = vsel %vm1166, %v1165, %v1147
    %vm1168 = vcmask 1042432
    %v1169 = vsel %vm1168, %v1167, %v1150
    %v1170 = vsel %vm62, %v1169, %v1153
    %vm1171 = vcmask 1044480
    %v1172 = vsel %vm1171, %v1170, %v1156
    %vm1173 = vcmask 1045504
    %v1174 = vsel %vm1173, %v1172, %v1159
    %vm1175 = vcmask 1046528
    %v1176 = vsel %vm1175, %v1174, %v1162
    %1178 = vset.pattern.permute.xlu0 0
    %1179 = vperm.xlu0 %1178, %v1176
    %v1180 = vpop.permute.xlu0 %1179
    %v1190 = vrot.slane %v170, 7
    %vm1191 = vcmask 1041409
    %v1192 = vsel %vm1191, %v1190, %v141
    %v1193 = vrot.slane %v199, 6
    %vm1194 = vcmask 1042434
    %v1195 = vsel %vm1194, %v1193, %v1192
    %v1196 = vrot.slane %v228, 5
    %vm1197 = vcmask 1043459
    %v1198 = vsel %vm1197, %v1196, %v1195
    %v1199 = vrot.slane %v257, 4
    %vm1200 = vcmask 1044484
    %v1201 = vsel %vm1200, %v1199, %v1198
    %v1202 = vrot.slane %v286, 3
    %vm1203 = vcmask 1045509
    %v1204 = vsel %vm1203, %v1202, %v1201
    %v1205 = vrot.slane %v315, 2
    %vm1206 = vcmask 1046534
    %v1207 = vsel %vm1206, %v1205, %v1204
    %v1208 = vrot.slane %v344, 1
    %vm1209 = vcmask 1047559
    %v1210 = vsel %vm1209, %v1208, %v1207
    %v1212 = vmul.f32 %v1180, %v1210
    %1213 = vset.pattern.permute.xlu0 1
    %1214 = vperm.xlu0 %1213, %v1176
    %v1215 = vpop.permute.xlu0 %1214
    %v1217 = vrot.slane %v141, 1
    %v1218 = vsel %vm1191, %v170, %v1217
    %v1219 = vrot.slane %v199, 7
    %v1220 = vsel %vm1194, %v1219, %v1218
    %v1221 = vrot.slane %v228, 6
    %v1222 = vsel %vm1197, %v1221, %v1220
    %v1223 = vrot.slane %v257, 5
    %v1224 = vsel %vm1200, %v1223, %v1222
    %v1225 = vrot.slane %v286, 4
    %v1226 = vsel %vm1203, %v1225, %v1224
    %v1227 = vrot.slane %v315, 3
    %v1228 = vsel %vm1206, %v1227, %v1226
    %v1229 = vrot.slane %v344, 2
    %v1230 = vsel %vm1209, %v1229, %v1228
    %v1232 = vmul.f32 %v1215, %v1230
    %v1233 = vadd.f32 %v1212, %v1232
    %1234 = vset.pattern.permute.xlu0 2
    %1235 = vperm.xlu0 %1234, %v1176
    %v1236 = vpop.permute.xlu0 %1235
    %v1238 = vrot.slane %v141, 2
    %v1239 = vrot.slane %v170, 1
    %v1240 = vsel %vm1191, %v1239, %v1238
    %v1241 = vsel %vm1194, %v199, %v1240
    %v1242 = vrot.slane %v228, 7
    %v1243 = vsel %vm1197, %v1242, %v1241
    %v1244 = vrot.slane %v257, 6
    %v1245 = vsel %vm1200, %v1244, %v1243
    %v1246 = vrot.slane %v286, 5
    %v1247 = vsel %vm1203, %v1246, %v1245
    %v1248 = vrot.slane %v315, 4
    %v1249 = vsel %vm1206, %v1248, %v1247
    %v1250 = vrot.slane %v344, 3
    %v1251 = vsel %vm1209, %v1250, %v1249
    %v1253 = vmul.f32 %v1236, %v1251
    %v1254 = vadd.f32 %v1233, %v1253
    %1255 = vset.pattern.permute.xlu0 3
    %1256 = vperm.xlu0 %1255, %v1176
    %v1257 = vpop.permute.xlu0 %1256
    %v1259 = vrot.slane %v141, 3
    %v1260 = vrot.slane %v170, 2
    %v1261 = vsel %vm1191, %v1260, %v1259
    %v1262 = vrot.slane %v199, 1
    %v1263 = vsel %vm1194, %v1262, %v1261
    %v1264 = vsel %vm1197, %v228, %v1263
    %v1265 = vrot.slane %v257, 7
    %v1266 = vsel %vm1200, %v1265, %v1264
    %v1267 = vrot.slane %v286, 6
    %v1268 = vsel %vm1203, %v1267, %v1266
    %v1269 = vrot.slane %v315, 5
    %v1270 = vsel %vm1206, %v1269, %v1268
    %v1271 = vrot.slane %v344, 4
    %v1272 = vsel %vm1209, %v1271, %v1270
    %v1274 = vmul.f32 %v1257, %v1272
    %v1275 = vadd.f32 %v1254, %v1274
    %s1276 = sld [smem:[#allocation2]]
    %v1277 = vstv %s1276
    %v1278 = vadd.f32 %v1275, %v1277
    %1279 = vst.msk [vmem:[#allocation6] sm:$0xff] %vm113, %v1278
    // Predicated region
    $region46: #{evolve_gcn_reg_forward.1} parent=1 // pred_check
      _
    $region47: #{evolve_gcn_reg_forward.1} parent=1 // pred_check_branch
      %1281 = sbr.rel (0) target = $region49
    $region48: #{evolve_gcn_reg_forward.1} parent=1 // pred_region
      %1283 = vsyncadd [#allocation4], 0
      %s1285 = sshll.u32 [#allocation6], 4
      %s1286 = int_to_ptr.vmem [resolvable:$true] %s1285
      %s1287 = sshll.u32 %s10, 4
      %s1288 = int_to_ptr.hbm [resolvable:$true] %s1287
      %1290 = dma.vmem_to_hbm [thread:$0]  %s1286, 128, %s1288, [#allocation4]
    $region49: #{evolve_gcn_reg_forward.1} parent=1 // pred_fallthru
      _
    // Predicated region
    $region50: #{evolve_gcn_reg_forward.1} parent=1 // pred_check
      _
    $region51: #{evolve_gcn_reg_forward.1} parent=1 // pred_check_branch
      %1292 = sbr.rel (0) target = $region53
    $region52: #{evolve_gcn_reg_forward.1} parent=1 // pred_region
      %1294 = dma.done [#allocation4], 128
    $region53: #{evolve_gcn_reg_forward.1} parent=1 // pred_fallthru
      _
    %1295 = vsyncpa [#allocation4], 1
    %1296 = vsyncpa [#allocation5], 1

</llo_original>
